<compile_context>
chip_gen: v7x
topology: tpu7x:2x2x1
jax: 0.10.0
libtpu: 0.0.40
codegen_flags: <defaults>
</compile_context>

<pallas_src>
import functools

import numpy as np
import jax
import jax.numpy as jnp
from jax import lax
from jax.experimental import pallas as pl
from jax.experimental.pallas import tpu as pltpu


def _round_up(x, m):
    return ((x + m - 1) // m) * m


_MAX_UNROLLED_HIDDEN = 8   # static unroll below this per-stack hidden-layer count


# ----------------------------------------------------------------------------
# Fused kernel: runs the whole encoder+decoder chain on one batch tile.
#   x_ref      : (TM, in_f)            raw (unpadded-lane) activations tile, f32
#   w_enc_ref  : (in_f, F_pad)         encoder expand weight   (bf16, resident)
#   w_dec_ref  : (F_out, F_pad)        decoder expand weight   (bf16, resident)
#   w_hid_ref  : (H, F_pad, F_pad)     hidden (identity) weights (bf16, resident)
#   w_con_ref  : (2, F_pad, F_out)     encoder/decoder contract weights (bf16, resident)
#   b_*_ref    : f32 biases (all zero for this module, kept for generality)
#   ypred_ref, fx_ref : (TM, F_out)    lane-dense outputs
# Zero padding is self-consistent: padded lanes stay exactly 0 through every layer
# (zero weight rows/cols, zero bias, relu(0)=0), so the valid region matches the
# unpadded computation.
# ----------------------------------------------------------------------------
def _fused_mlp_kernel(n_hidden, x_ref, w_enc_ref, w_dec_ref, w_hid_ref, w_con_ref,
                      b_exp_ref, b_hid_ref, b_con_ref, ypred_ref, fx_ref):
    def dense(y, w, b, relu):
        # bf16 operands, f32 MXU accumulation.
        acc = jnp.dot(y.astype(w.dtype), w, preferred_element_type=jnp.float32) + b
        return jnp.maximum(acc, 0.0) if relu else acc

    def hidden_chain(y, start):
        if n_hidden == 0:
            return y
        if n_hidden <= _MAX_UNROLLED_HIDDEN:
            for t in range(n_hidden):                       # static unroll (small depth)
                y = dense(y, w_hid_ref[start + t], b_hid_ref[start + t], True)
            return y
        # Deep configs: dynamic slab indexing + fori_loop keeps code size / vregs flat.
        def body(t, yy):
            return dense(yy, w_hid_ref[start + t], b_hid_ref[start + t], True)
        return lax.fori_loop(0, n_hidden, body, y)

    y = x_ref[...]                                          # (TM, in_f) f32
    # -------- encoder --------
    y = dense(y, w_enc_ref[...], b_exp_ref[0], True)        # expand: (TM, F_pad)
    y = hidden_chain(y, 0)
    y = dense(y, w_con_ref[0], b_con_ref[0], False)         # contract -> y_pred (TM, F_out)
    ypred_ref[...] = y.astype(ypred_ref.dtype)
    # -------- decoder --------
    y = dense(y, w_dec_ref[...], b_exp_ref[1], True)        # expand: (TM, F_pad)
    y = hidden_chain(y, n_hidden)
    y = dense(y, w_con_ref[1], b_con_ref[1], False)         # contract -> fx (TM, F_out)
    fx_ref[...] = y.astype(fx_ref.dtype)


def _choose_tile_m(batch, *, sublane=8, max_tile=512):
    """Pick the batch tile: big (amortize per-step overhead) but megacore-aware (>=2 tiles)."""
    m_pad = _round_up(max(batch, sublane), sublane)
    tm = min(m_pad, max_tile)
    # v7x has two TensorCores; make the "parallel" batch grid have >=2 tiles when possible.
    if pl.cdiv(m_pad, tm) < 2 and m_pad >= 2 * sublane:
        tm = _round_up(pl.cdiv(m_pad, 2), sublane)
    m_pad = _round_up(m_pad, tm)
    return tm, m_pad


def _fused_forward(y0, p, *, max_tile, single_buffer_weights):
    batch, in_f = y0.shape
    assert in_f == p["input_size"]
    F_pad, F_out, n_hidden = p["F_pad"], p["F_out"], p["n_hidden"]
    H = p["w_hid"].shape[0]

    tm, m_pad = _choose_tile_m(batch, max_tile=max_tile)
    # Only a tiny row-pad (no lane-padded HBM copy of the input).
    x = y0 if m_pad == batch else jnp.pad(y0, ((0, m_pad - batch), (0, 0)))

    def resident(block_shape, index_map):
        # Constant index_map -> fetched once; single buffer is sufficient.
        if single_buffer_weights:
            return pl.BlockSpec(block_shape, index_map, pipeline_mode=pl.Buffered(1))
        return pl.BlockSpec(block_shape, index_map)

    in_specs = [
        pl.BlockSpec((tm, in_f), lambda i: (i, 0)),            # streamed activations
        resident((in_f, F_pad), lambda i: (0, 0)),             # encoder expand W
        resident((F_out, F_pad), lambda i: (0, 0)),            # decoder expand W
        resident((H, F_pad, F_pad), lambda i: (0, 0, 0)),      # hidden Ws
        resident((2, F_pad, F_out), lambda i: (0, 0, 0)),      # contract Ws
        resident((2, 1, F_pad), lambda i: (0, 0, 0)),          # expand biases
        resident((H, 1, F_pad), lambda i: (0, 0, 0)),          # hidden biases
        resident((2, 1, F_out), lambda i: (0, 0, 0)),          # contract biases
    ]
    out_spec = pl.BlockSpec((tm, F_out), lambda i: (i, 0))

    weights = (p["w_enc"], p["w_dec"], p["w_hid"], p["w_con"])
    biases = (p["b_exp"], p["b_hid"], p["b_con"])
    resident_bytes = sum(int(a.size) * a.dtype.itemsize for a in weights + biases)
    stream_bytes = (tm * in_f + 2 * tm * F_out) * 4            # per-step x + 2 outputs (f32)
    wbuf = 1 if single_buffer_weights else 2
    need = wbuf * resident_bytes + 2 * stream_bytes + 4 * tm * F_pad * 4
    # Explicit scoped-VMEM budget: above v5e's 16 MiB default, with headroom, capped sanely.
    vmem_limit = int(min(max(2 * need + (4 << 20), 32 << 20), 100 << 20))

    flops = 2 * m_pad * (in_f * F_pad + F_out * F_pad
                         + 2 * n_hidden * F_pad * F_pad + 2 * F_pad * F_out)
    bytes_accessed = int(x.size * 4 + resident_bytes + 2 * m_pad * F_out * 4)
    cost = pl.CostEstimate(flops=flops, transcendentals=0, bytes_accessed=bytes_accessed)

    kernel = functools.partial(_fused_mlp_kernel, n_hidden)

    ypred_pad, fx_pad = pl.pallas_call(
        kernel,
        out_shape=(jax.ShapeDtypeStruct((m_pad, F_out), y0.dtype),
                   jax.ShapeDtypeStruct((m_pad, F_out), y0.dtype)),
        grid=(m_pad // tm,),
        in_specs=in_specs,
        out_specs=(out_spec, out_spec),
        compiler_params=pltpu.CompilerParams(
            dimension_semantics=("parallel",),       # batch tiles shard across TCs on v7x
            vmem_limit_bytes=vmem_limit),
        cost_estimate=cost,
    )(x, p["w_enc"], p["w_dec"], p["w_hid"], p["w_con"],
      p["b_exp"], p["b_hid"], p["b_con"])
    jax.block_until_ready((ypred_pad, fx_pad))
    return ypred_pad[:batch, :in_f], fx_pad[:batch, :in_f]


def fused_forward(y0, params, *, max_tile=512):
    """y0: (batch, input_size) f32. Returns (y_pred, fx), each (batch, input_size)."""
    try:
        return _fused_forward(y0, params, max_tile=max_tile, single_buffer_weights=True)
    except Exception:
        # If pl.Buffered(1) is rejected by this jax/libtpu combo, fall back to the
        # default double-buffered resident weights (still fetched only once).
        return _fused_forward(y0, params, max_tile=max_tile, single_buffer_weights=False)


# ----------------------------------------------------------------------------
# Deterministic parameters -- mirrors identity_net.initialize_network.
# Kernel weights use (in_features, out_features) layout so the kernel computes x @ W + b.
# ----------------------------------------------------------------------------
def _original_column(input_size, width_scale):
    net_width = 2 * input_size * width_scale
    atom = np.array([[1.0], [-1.0]], dtype=np.float64)
    col = np.tile(atom, (width_scale, 1))
    z = np.zeros(((input_size - 1) * 2 * width_scale, 1))
    one_column = np.vstack((col, z))
    original_column = one_column.copy()
    for _ in range(input_size - 1):
        one_column = np.roll(one_column, 2 * width_scale, axis=0)
        original_column = np.hstack((original_column, one_column))
    assert original_column.shape == (net_width, input_size)
    return original_column.astype(np.float32)


def _base_weights(input_size, width_scale):
    net_width = 2 * input_size * width_scale
    oc = _original_column(input_size, width_scale)               # (net_width, input_size)
    w_expand = (oc / float(width_scale)).T.astype(np.float32)    # (input_size, net_width)
    w_contract = oc.astype(np.float32)                           # (net_width, input_size)
    w_hidden = np.eye(net_width, dtype=np.float32)               # (net_width, net_width)
    return w_expand, w_hidden, w_contract


def pack_params(input_size, width_scale, net_depth, weight_dtype=jnp.bfloat16):
    """Pack the 2*net_depth+2 layers into lane-dense resident slabs (no square-padding
    of the small expand/contract layers)."""
    w_expand, w_hidden, w_contract = _base_weights(input_size, width_scale)
    in_f, net_width = w_expand.shape
    F_pad = _round_up(net_width, 128)
    F_out = _round_up(in_f, 128)
    n_hidden = net_depth - 1                     # uniform relu'd hidden layers per stack
    H = max(2 * n_hidden, 1)                     # dummy slab of 1 if there are none

    w_enc = np.zeros((in_f, F_pad), np.float32)
    w_enc[:, :net_width] = w_expand
    w_dec = np.zeros((F_out, F_pad), np.float32)
    w_dec[:in_f, :net_width] = w_expand
    w_hid = np.zeros((H, F_pad, F_pad), np.float32)
    if n_hidden > 0:
        w_hid[:2 * n_hidden, :net_width, :net_width] = w_hidden
    w_con = np.zeros((2, F_pad, F_out), np.float32)
    w_con[:, :net_width, :in_f] = w_contract

    b_exp = np.zeros((2, 1, F_pad), np.float32)
    b_hid = np.zeros((H, 1, F_pad), np.float32)
    b_con = np.zeros((2, 1, F_out), np.float32)

    return dict(
        w_enc=jnp.asarray(w_enc, weight_dtype),
        w_dec=jnp.asarray(w_dec, weight_dtype),
        w_hid=jnp.asarray(w_hid, weight_dtype),
        w_con=jnp.asarray(w_con, weight_dtype),
        b_exp=jnp.asarray(b_exp), b_hid=jnp.asarray(b_hid), b_con=jnp.asarray(b_con),
        n_hidden=n_hidden, net_depth=net_depth,
        input_size=in_f, net_width=net_width, F_pad=F_pad, F_out=F_out,
    )


def logical_layers(input_size, width_scale, net_depth, weight_dtype=jnp.bfloat16):
    """Per-layer (W, relu) list in kernel (in,out) layout, matching pack_params' dtype."""
    w_expand, w_hidden, w_contract = _base_weights(input_size, width_scale)
    stack = ([(w_expand, True)] + [(w_hidden, True)] * (net_depth - 1)
             + [(w_contract, False)])
    layers = stack + stack                       # encoder then decoder (identical init)
    return [(jnp.asarray(w, weight_dtype), relu) for (w, relu) in layers]


# ----------------------------------------------------------------------------
# Plain-JAX reference (same mixed precision as the kernel: bf16 operands, f32 accum).
# Biases are identically zero in this module's init so they are omitted here.
# ----------------------------------------------------------------------------
def reference_forward(y0, layers, net_depth):
    y = y0
    y_pred = fx = None
    for m, (w, relu) in enumerate(layers):
        y = jnp.dot(y.astype(w.dtype), w, preferred_element_type=jnp.float32)
        if relu:
            y = jnp.maximum(y, 0.0)
        if m == net_depth:
            y_pred = y
        elif m == 2 * net_depth + 1:
            fx = y
    return y_pred, fx


if __name__ == "__main__":
    # Small, module-consistent configuration.
    input_size = 8      # db['net_input_size']
    width_scale = 2     # db['width_scale']
    net_depth = 2       # db['net_depth']
    batch = 4

    params = pack_params(input_size, width_scale, net_depth, weight_dtype=jnp.bfloat16)
    layers = logical_layers(input_size, width_scale, net_depth, weight_dtype=jnp.bfloat16)

    key = jax.random.PRNGKey(0)
    y0 = jax.random.normal(key, (batch, input_size), dtype=jnp.float32)

    y_pred, fx = fused_forward(y0, params)
    y_pred, fx = jax.block_until_ready((y_pred, fx))

    # Tight check against the mixed-precision reference.
    y_pred_ref, fx_ref = reference_forward(y0, layers, net_depth)
    np.testing.assert_allclose(np.asarray(y_pred), np.asarray(y_pred_ref), rtol=1e-5, atol=1e-5)
    np.testing.assert_allclose(np.asarray(fx), np.asarray(fx_ref), rtol=1e-5, atol=1e-5)

    # With this init the network is the identity map; tolerance covers the single bf16
    # rounding of the activations on the MXU path (weights are exactly representable).
    np.testing.assert_allclose(np.asarray(y_pred), np.asarray(y0), rtol=1e-2, atol=1e-2)
    np.testing.assert_allclose(np.asarray(fx), np.asarray(y0), rtol=1e-2, atol=1e-2)

    print("KERNEL_OK")
</pallas_src>

<mosaic_0001>
module attributes {stable_mosaic.version = 11 : i64} {
  func.func @_fused_mlp_kernel(%arg0: i32, %arg1: memref<8x8xf32, #tpu.memory_space<vmem>>, %arg2: memref<8x128xbf16, #tpu.memory_space<vmem>>, %arg3: memref<128x128xbf16, #tpu.memory_space<vmem>>, %arg4: memref<2x128x128xbf16, #tpu.memory_space<vmem>>, %arg5: memref<2x128x128xbf16, #tpu.memory_space<vmem>>, %arg6: memref<2x1x128xf32, #tpu.memory_space<vmem>>, %arg7: memref<2x1x128xf32, #tpu.memory_space<vmem>>, %arg8: memref<2x1x128xf32, #tpu.memory_space<vmem>>, %arg9: memref<8x128xf32, #tpu.memory_space<vmem>>, %arg10: memref<8x128xf32, #tpu.memory_space<vmem>>) attributes {dimension_semantics = [#tpu.dimension_semantics<parallel>], iteration_bounds = array<i64: 1>, scalar_prefetch = 0 : i64, scratch_operands = 0 : i64, tpu.core_type = #tpu.core_type<tc>, window_params = [{transform_indices = @transform_0, window_bounds = array<i64: 8, 8>}, {pipeline_mode = #tpu.pipeline_mode<synchronous>, transform_indices = @transform_1, window_bounds = array<i64: 8, 128>}, {pipeline_mode = #tpu.pipeline_mode<synchronous>, transform_indices = @transform_2, window_bounds = array<i64: 128, 128>}, {pipeline_mode = #tpu.pipeline_mode<synchronous>, transform_indices = @transform_3, window_bounds = array<i64: 2, 128, 128>}, {pipeline_mode = #tpu.pipeline_mode<synchronous>, transform_indices = @transform_4, window_bounds = array<i64: 2, 128, 128>}, {pipeline_mode = #tpu.pipeline_mode<synchronous>, transform_indices = @transform_5, window_bounds = array<i64: 2, 1, 128>}, {pipeline_mode = #tpu.pipeline_mode<synchronous>, transform_indices = @transform_6, window_bounds = array<i64: 2, 1, 128>}, {pipeline_mode = #tpu.pipeline_mode<synchronous>, transform_indices = @transform_7, window_bounds = array<i64: 2, 1, 128>}, {transform_indices = @transform_8, window_bounds = array<i64: 8, 128>}, {transform_indices = @transform_9, window_bounds = array<i64: 8, 128>}]} {
    %c0 = arith.constant 0 : index
    %c0_0 = arith.constant 0 : index
    %0 = vector.load %arg1[%c0, %c0_0] : memref<8x8xf32, #tpu.memory_space<vmem>>, vector<8x8xf32>
    %c0_1 = arith.constant 0 : index
    %c0_2 = arith.constant 0 : index
    %1 = vector.load %arg2[%c0_1, %c0_2] : memref<8x128xbf16, #tpu.memory_space<vmem>>, vector<8x128xbf16>
    %c0_3 = arith.constant 0 : index
    %c0_4 = arith.constant 0 : index
    %c0_5 = arith.constant 0 : index
    %2 = vector.load %arg6[%c0_3, %c0_4, %c0_5] : memref<2x1x128xf32, #tpu.memory_space<vmem>>, vector<1x1x128xf32>
    %3 = vector.shape_cast %2 : vector<1x1x128xf32> to vector<1x128xf32>
    %4 = arith.truncf %0 : vector<8x8xf32> to vector<8x8xbf16>
    %cst = arith.constant dense<0.000000e+00> : vector<8x128xf32>
    %5 = tpu.matmul %4, %1, %cst {dimension_numbers = #tpu.dot_dimension_numbers<[1], [0], [0], [1], [0, 0, 1, 1], [], []>} : vector<8x8xbf16>, vector<8x128xbf16>, vector<8x128xf32> -> vector<8x128xf32>
    %6 = vector.broadcast %3 : vector<1x128xf32> to vector<8x128xf32>
    %7 = arith.addf %5, %6 : vector<8x128xf32>
    %cst_6 = arith.constant 0.000000e+00 : f32
    %8 = vector.broadcast %cst_6 : f32 to vector<8x128xf32>
    %9 = arith.maximumf %7, %8 : vector<8x128xf32>
    %c0_7 = arith.constant 0 : index
    %c0_8 = arith.constant 0 : index
    %c0_9 = arith.constant 0 : index
    %10 = vector.load %arg4[%c0_7, %c0_8, %c0_9] : memref<2x128x128xbf16, #tpu.memory_space<vmem>>, vector<1x128x128xbf16>
    %11 = vector.shape_cast %10 : vector<1x128x128xbf16> to vector<128x128xbf16>
    %c0_10 = arith.constant 0 : index
    %c0_11 = arith.constant 0 : index
    %c0_12 = arith.constant 0 : index
    %12 = vector.load %arg7[%c0_10, %c0_11, %c0_12] : memref<2x1x128xf32, #tpu.memory_space<vmem>>, vector<1x1x128xf32>
    %13 = vector.shape_cast %12 : vector<1x1x128xf32> to vector<1x128xf32>
    %14 = arith.truncf %9 : vector<8x128xf32> to vector<8x128xbf16>
    %cst_13 = arith.constant dense<0.000000e+00> : vector<8x128xf32>
    %15 = tpu.matmul %14, %11, %cst_13 {dimension_numbers = #tpu.dot_dimension_numbers<[1], [0], [0], [1], [0, 0, 1, 1], [], []>} : vector<8x128xbf16>, vector<128x128xbf16>, vector<8x128xf32> -> vector<8x128xf32>
    %16 = vector.broadcast %13 : vector<1x128xf32> to vector<8x128xf32>
    %17 = arith.addf %15, %16 : vector<8x128xf32>
    %cst_14 = arith.constant 0.000000e+00 : f32
    %18 = vector.broadcast %cst_14 : f32 to vector<8x128xf32>
    %19 = arith.maximumf %17, %18 : vector<8x128xf32>
    %c0_15 = arith.constant 0 : index
    %c0_16 = arith.constant 0 : index
    %c0_17 = arith.constant 0 : index
    %20 = vector.load %arg5[%c0_15, %c0_16, %c0_17] : memref<2x128x128xbf16, #tpu.memory_space<vmem>>, vector<1x128x128xbf16>
    %21 = vector.shape_cast %20 : vector<1x128x128xbf16> to vector<128x128xbf16>
    %c0_18 = arith.constant 0 : index
    %c0_19 = arith.constant 0 : index
    %c0_20 = arith.constant 0 : index
    %22 = vector.load %arg8[%c0_18, %c0_19, %c0_20] : memref<2x1x128xf32, #tpu.memory_space<vmem>>, vector<1x1x128xf32>
    %23 = vector.shape_cast %22 : vector<1x1x128xf32> to vector<1x128xf32>
    %24 = arith.truncf %19 : vector<8x128xf32> to vector<8x128xbf16>
    %cst_21 = arith.constant dense<0.000000e+00> : vector<8x128xf32>
    %25 = tpu.matmul %24, %21, %cst_21 {dimension_numbers = #tpu.dot_dimension_numbers<[1], [0], [0], [1], [0, 0, 1, 1], [], []>} : vector<8x128xbf16>, vector<128x128xbf16>, vector<8x128xf32> -> vector<8x128xf32>
    %26 = vector.broadcast %23 : vector<1x128xf32> to vector<8x128xf32>
    %27 = arith.addf %25, %26 : vector<8x128xf32>
    %c0_22 = arith.constant 0 : index
    %c0_23 = arith.constant 0 : index
    %28 = vector.load %arg9[%c0_22, %c0_23] : memref<8x128xf32, #tpu.memory_space<vmem>>, vector<8x128xf32>
    tpu.vector_store %arg9[%c0_22, %c0_23], %27 {strides = array<i32>} : memref<8x128xf32, #tpu.memory_space<vmem>>, vector<8x128xf32>,
    %c0_24 = arith.constant 0 : index
    %c0_25 = arith.constant 0 : index
    %29 = vector.load %arg3[%c0_24, %c0_25] : memref<128x128xbf16, #tpu.memory_space<vmem>>, vector<128x128xbf16>
    %c1 = arith.constant 1 : index
    %c0_26 = arith.constant 0 : index
    %c0_27 = arith.constant 0 : index
    %30 = vector.load %arg6[%c1, %c0_26, %c0_27] : memref<2x1x128xf32, #tpu.memory_space<vmem>>, vector<1x1x128xf32>
    %31 = vector.shape_cast %30 : vector<1x1x128xf32> to vector<1x128xf32>
    %32 = arith.truncf %27 : vector<8x128xf32> to vector<8x128xbf16>
    %cst_28 = arith.constant dense<0.000000e+00> : vector<8x128xf32>
    %33 = tpu.matmul %32, %29, %cst_28 {dimension_numbers = #tpu.dot_dimension_numbers<[1], [0], [0], [1], [0, 0, 1, 1], [], []>} : vector<8x128xbf16>, vector<128x128xbf16>, vector<8x128xf32> -> vector<8x128xf32>
    %34 = vector.broadcast %31 : vector<1x128xf32> to vector<8x128xf32>
    %35 = arith.addf %33, %34 : vector<8x128xf32>
    %cst_29 = arith.constant 0.000000e+00 : f32
    %36 = vector.broadcast %cst_29 : f32 to vector<8x128xf32>
    %37 = arith.maximumf %35, %36 : vector<8x128xf32>
    %c1_30 = arith.constant 1 : index
    %c0_31 = arith.constant 0 : index
    %c0_32 = arith.constant 0 : index
    %38 = vector.load %arg4[%c1_30, %c0_31, %c0_32] : memref<2x128x128xbf16, #tpu.memory_space<vmem>>, vector<1x128x128xbf16>
    %39 = vector.shape_cast %38 : vector<1x128x128xbf16> to vector<128x128xbf16>
    %c1_33 = arith.constant 1 : index
    %c0_34 = arith.constant 0 : index
    %c0_35 = arith.constant 0 : index
    %40 = vector.load %arg7[%c1_33, %c0_34, %c0_35] : memref<2x1x128xf32, #tpu.memory_space<vmem>>, vector<1x1x128xf32>
    %41 = vector.shape_cast %40 : vector<1x1x128xf32> to vector<1x128xf32>
    %42 = arith.truncf %37 : vector<8x128xf32> to vector<8x128xbf16>
    %cst_36 = arith.constant dense<0.000000e+00> : vector<8x128xf32>
    %43 = tpu.matmul %42, %39, %cst_36 {dimension_numbers = #tpu.dot_dimension_numbers<[1], [0], [0], [1], [0, 0, 1, 1], [], []>} : vector<8x128xbf16>, vector<128x128xbf16>, vector<8x128xf32> -> vector<8x128xf32>
    %44 = vector.broadcast %41 : vector<1x128xf32> to vector<8x128xf32>
    %45 = arith.addf %43, %44 : vector<8x128xf32>
    %cst_37 = arith.constant 0.000000e+00 : f32
    %46 = vector.broadcast %cst_37 : f32 to vector<8x128xf32>
    %47 = arith.maximumf %45, %46 : vector<8x128xf32>
    %c1_38 = arith.constant 1 : index
    %c0_39 = arith.constant 0 : index
    %c0_40 = arith.constant 0 : index
    %48 = vector.load %arg5[%c1_38, %c0_39, %c0_40] : memref<2x128x128xbf16, #tpu.memory_space<vmem>>, vector<1x128x128xbf16>
    %49 = vector.shape_cast %48 : vector<1x128x128xbf16> to vector<128x128xbf16>
    %c1_41 = arith.constant 1 : index
    %c0_42 = arith.constant 0 : index
    %c0_43 = arith.constant 0 : index
    %50 = vector.load %arg8[%c1_41, %c0_42, %c0_43] : memref<2x1x128xf32, #tpu.memory_space<vmem>>, vector<1x1x128xf32>
    %51 = vector.shape_cast %50 : vector<1x1x128xf32> to vector<1x128xf32>
    %52 = arith.truncf %47 : vector<8x128xf32> to vector<8x128xbf16>
    %cst_44 = arith.constant dense<0.000000e+00> : vector<8x128xf32>
    %53 = tpu.matmul %52, %49, %cst_44 {dimension_numbers = #tpu.dot_dimension_numbers<[1], [0], [0], [1], [0, 0, 1, 1], [], []>} : vector<8x128xbf16>, vector<128x128xbf16>, vector<8x128xf32> -> vector<8x128xf32>
    %54 = vector.broadcast %51 : vector<1x128xf32> to vector<8x128xf32>
    %55 = arith.addf %53, %54 : vector<8x128xf32>
    %c0_45 = arith.constant 0 : index
    %c0_46 = arith.constant 0 : index
    %56 = vector.load %arg10[%c0_45, %c0_46] : memref<8x128xf32, #tpu.memory_space<vmem>>, vector<8x128xf32>
    tpu.vector_store %arg10[%c0_45, %c0_46], %55 {strides = array<i32>} : memref<8x128xf32, #tpu.memory_space<vmem>>, vector<8x128xf32>,
    return
  }
  func.func @transform_0(%arg0: i32) -> (i32, i32) {
    %c0_i32 = arith.constant 0 : i32
    %c0_i32_0 = arith.constant 0 : i32
    return %arg0, %c0_i32 : i32, i32
  }
  func.func @transform_1(%arg0: i32) -> (i32, i32) {
    %c0_i32 = arith.constant 0 : i32
    %c0_i32_0 = arith.constant 0 : i32
    %c0_i32_1 = arith.constant 0 : i32
    return %c0_i32, %c0_i32_0 : i32, i32
  }
  func.func @transform_2(%arg0: i32) -> (i32, i32) {
    %c0_i32 = arith.constant 0 : i32
    %c0_i32_0 = arith.constant 0 : i32
    %c0_i32_1 = arith.constant 0 : i32
    return %c0_i32, %c0_i32_0 : i32, i32
  }
  func.func @transform_3(%arg0: i32) -> (i32, i32, i32) {
    %c0_i32 = arith.constant 0 : i32
    %c0_i32_0 = arith.constant 0 : i32
    %c0_i32_1 = arith.constant 0 : i32
    %c0_i32_2 = arith.constant 0 : i32
    return %c0_i32, %c0_i32_0, %c0_i32_1 : i32, i32, i32
  }
  func.func @transform_4(%arg0: i32) -> (i32, i32, i32) {
    %c0_i32 = arith.constant 0 : i32
    %c0_i32_0 = arith.constant 0 : i32
    %c0_i32_1 = arith.constant 0 : i32
    %c0_i32_2 = arith.constant 0 : i32
    return %c0_i32, %c0_i32_0, %c0_i32_1 : i32, i32, i32
  }
  func.func @transform_5(%arg0: i32) -> (i32, i32, i32) {
    %c0_i32 = arith.constant 0 : i32
    %c0_i32_0 = arith.constant 0 : i32
    %c0_i32_1 = arith.constant 0 : i32
    %c0_i32_2 = arith.constant 0 : i32
    return %c0_i32, %c0_i32_0, %c0_i32_1 : i32, i32, i32
  }
  func.func @transform_6(%arg0: i32) -> (i32, i32, i32) {
    %c0_i32 = arith.constant 0 : i32
    %c0_i32_0 = arith.constant 0 : i32
    %c0_i32_1 = arith.constant 0 : i32
    %c0_i32_2 = arith.constant 0 : i32
    return %c0_i32, %c0_i32_0, %c0_i32_1 : i32, i32, i32
  }
  func.func @transform_7(%arg0: i32) -> (i32, i32, i32) {
    %c0_i32 = arith.constant 0 : i32
    %c0_i32_0 = arith.constant 0 : i32
    %c0_i32_1 = arith.constant 0 : i32
    %c0_i32_2 = arith.constant 0 : i32
    return %c0_i32, %c0_i32_0, %c0_i32_1 : i32, i32, i32
  }
  func.func @transform_8(%arg0: i32) -> (i32, i32) {
    %c0_i32 = arith.constant 0 : i32
    %c0_i32_0 = arith.constant 0 : i32
    return %arg0, %c0_i32 : i32, i32
  }
  func.func @transform_9(%arg0: i32) -> (i32, i32) {
    %c0_i32 = arith.constant 0 : i32
    %c0_i32_0 = arith.constant 0 : i32
    return %arg0, %c0_i32 : i32, i32
  }
}

module attributes {stable_mosaic.version = 11 : i64} {
  func.func @_fused_mlp_kernel(%arg0: i32, %arg1: memref<8x8xf32, #tpu.memory_space<vmem>>, %arg2: memref<8x128xbf16, #tpu.memory_space<vmem>>, %arg3: memref<128x128xbf16, #tpu.memory_space<vmem>>, %arg4: memref<2x128x128xbf16, #tpu.memory_space<vmem>>, %arg5: memref<2x128x128xbf16, #tpu.memory_space<vmem>>, %arg6: memref<2x1x128xf32, #tpu.memory_space<vmem>>, %arg7: memref<2x1x128xf32, #tpu.memory_space<vmem>>, %arg8: memref<2x1x128xf32, #tpu.memory_space<vmem>>, %arg9: memref<8x128xf32, #tpu.memory_space<vmem>>, %arg10: memref<8x128xf32, #tpu.memory_space<vmem>>) attributes {dimension_semantics = [#tpu.dimension_semantics<parallel>], iteration_bounds = array<i64: 1>, scalar_prefetch = 0 : i64, scratch_operands = 0 : i64, tpu.core_type = #tpu.core_type<tc>, window_params = [{transform_indices = @transform_0, window_bounds = array<i64: 8, 8>}, {pipeline_mode = #tpu.pipeline_mode<synchronous>, transform_indices = @transform_1, window_bounds = array<i64: 8, 128>}, {pipeline_mode = #tpu.pipeline_mode<synchronous>, transform_indices = @transform_2, window_bounds = array<i64: 128, 128>}, {pipeline_mode = #tpu.pipeline_mode<synchronous>, transform_indices = @transform_3, window_bounds = array<i64: 2, 128, 128>}, {pipeline_mode = #tpu.pipeline_mode<synchronous>, transform_indices = @transform_4, window_bounds = array<i64: 2, 128, 128>}, {pipeline_mode = #tpu.pipeline_mode<synchronous>, transform_indices = @transform_5, window_bounds = array<i64: 2, 1, 128>}, {pipeline_mode = #tpu.pipeline_mode<synchronous>, transform_indices = @transform_6, window_bounds = array<i64: 2, 1, 128>}, {pipeline_mode = #tpu.pipeline_mode<synchronous>, transform_indices = @transform_7, window_bounds = array<i64: 2, 1, 128>}, {transform_indices = @transform_8, window_bounds = array<i64: 8, 128>}, {transform_indices = @transform_9, window_bounds = array<i64: 8, 128>}]} {
    %c0 = arith.constant 0 : index
    %c0_0 = arith.constant 0 : index
    %0 = vector.load %arg1[%c0, %c0_0] : memref<8x8xf32, #tpu.memory_space<vmem>>, vector<8x8xf32>
    %c0_1 = arith.constant 0 : index
    %c0_2 = arith.constant 0 : index
    %1 = vector.load %arg2[%c0_1, %c0_2] : memref<8x128xbf16, #tpu.memory_space<vmem>>, vector<8x128xbf16>
    %c0_3 = arith.constant 0 : index
    %c0_4 = arith.constant 0 : index
    %c0_5 = arith.constant 0 : index
    %2 = vector.load %arg6[%c0_3, %c0_4, %c0_5] : memref<2x1x128xf32, #tpu.memory_space<vmem>>, vector<1x1x128xf32>
    %3 = vector.shape_cast %2 : vector<1x1x128xf32> to vector<1x128xf32>
    %4 = arith.truncf %0 : vector<8x8xf32> to vector<8x8xbf16>
    %cst = arith.constant dense<0.000000e+00> : vector<8x128xf32>
    %5 = tpu.matmul %4, %1, %cst {dimension_numbers = #tpu.dot_dimension_numbers<[1], [0], [0], [1], [0, 0, 1, 1], [], []>} : vector<8x8xbf16>, vector<8x128xbf16>, vector<8x128xf32> -> vector<8x128xf32>
    %6 = vector.broadcast %3 : vector<1x128xf32> to vector<8x128xf32>
    %7 = arith.addf %5, %6 : vector<8x128xf32>
    %cst_6 = arith.constant 0.000000e+00 : f32
    %8 = vector.broadcast %cst_6 : f32 to vector<8x128xf32>
    %9 = arith.maximumf %7, %8 : vector<8x128xf32>
    %c0_7 = arith.constant 0 : index
    %c0_8 = arith.constant 0 : index
    %c0_9 = arith.constant 0 : index
    %10 = vector.load %arg4[%c0_7, %c0_8, %c0_9] : memref<2x128x128xbf16, #tpu.memory_space<vmem>>, vector<1x128x128xbf16>
    %11 = vector.shape_cast %10 : vector<1x128x128xbf16> to vector<128x128xbf16>
    %c0_10 = arith.constant 0 : index
    %c0_11 = arith.constant 0 : index
    %c0_12 = arith.constant 0 : index
    %12 = vector.load %arg7[%c0_10, %c0_11, %c0_12] : memref<2x1x128xf32, #tpu.memory_space<vmem>>, vector<1x1x128xf32>
    %13 = vector.shape_cast %12 : vector<1x1x128xf32> to vector<1x128xf32>
    %14 = arith.truncf %9 : vector<8x128xf32> to vector<8x128xbf16>
    %cst_13 = arith.constant dense<0.000000e+00> : vector<8x128xf32>
    %15 = tpu.matmul %14, %11, %cst_13 {dimension_numbers = #tpu.dot_dimension_numbers<[1], [0], [0], [1], [0, 0, 1, 1], [], []>} : vector<8x128xbf16>, vector<128x128xbf16>, vector<8x128xf32> -> vector<8x128xf32>
    %16 = vector.broadcast %13 : vector<1x128xf32> to vector<8x128xf32>
    %17 = arith.addf %15, %16 : vector<8x128xf32>
    %cst_14 = arith.constant 0.000000e+00 : f32
    %18 = vector.broadcast %cst_14 : f32 to vector<8x128xf32>
    %19 = arith.maximumf %17, %18 : vector<8x128xf32>
    %c0_15 = arith.constant 0 : index
    %c0_16 = arith.constant 0 : index
    %c0_17 = arith.constant 0 : index
    %20 = vector.load %arg5[%c0_15, %c0_16, %c0_17] : memref<2x128x128xbf16, #tpu.memory_space<vmem>>, vector<1x128x128xbf16>
    %21 = vector.shape_cast %20 : vector<1x128x128xbf16> to vector<128x128xbf16>
    %c0_18 = arith.constant 0 : index
    %c0_19 = arith.constant 0 : index
    %c0_20 = arith.constant 0 : index
    %22 = vector.load %arg8[%c0_18, %c0_19, %c0_20] : memref<2x1x128xf32, #tpu.memory_space<vmem>>, vector<1x1x128xf32>
    %23 = vector.shape_cast %22 : vector<1x1x128xf32> to vector<1x128xf32>
    %24 = arith.truncf %19 : vector<8x128xf32> to vector<8x128xbf16>
    %cst_21 = arith.constant dense<0.000000e+00> : vector<8x128xf32>
    %25 = tpu.matmul %24, %21, %cst_21 {dimension_numbers = #tpu.dot_dimension_numbers<[1], [0], [0], [1], [0, 0, 1, 1], [], []>} : vector<8x128xbf16>, vector<128x128xbf16>, vector<8x128xf32> -> vector<8x128xf32>
    %26 = vector.broadcast %23 : vector<1x128xf32> to vector<8x128xf32>
    %27 = arith.addf %25, %26 : vector<8x128xf32>
    %c0_22 = arith.constant 0 : index
    %c0_23 = arith.constant 0 : index
    %28 = vector.load %arg9[%c0_22, %c0_23] : memref<8x128xf32, #tpu.memory_space<vmem>>, vector<8x128xf32>
    tpu.vector_store %arg9[%c0_22, %c0_23], %27 {strides = array<i32>} : memref<8x128xf32, #tpu.memory_space<vmem>>, vector<8x128xf32>,
    %c0_24 = arith.constant 0 : index
    %c0_25 = arith.constant 0 : index
    %29 = vector.load %arg3[%c0_24, %c0_25] : memref<128x128xbf16, #tpu.memory_space<vmem>>, vector<128x128xbf16>
    %c1 = arith.constant 1 : index
    %c0_26 = arith.constant 0 : index
    %c0_27 = arith.constant 0 : index
    %30 = vector.load %arg6[%c1, %c0_26, %c0_27] : memref<2x1x128xf32, #tpu.memory_space<vmem>>, vector<1x1x128xf32>
    %31 = vector.shape_cast %30 : vector<1x1x128xf32> to vector<1x128xf32>
    %32 = arith.truncf %27 : vector<8x128xf32> to vector<8x128xbf16>
    %cst_28 = arith.constant dense<0.000000e+00> : vector<8x128xf32>
    %33 = tpu.matmul %32, %29, %cst_28 {dimension_numbers = #tpu.dot_dimension_numbers<[1], [0], [0], [1], [0, 0, 1, 1], [], []>} : vector<8x128xbf16>, vector<128x128xbf16>, vector<8x128xf32> -> vector<8x128xf32>
    %34 = vector.broadcast %31 : vector<1x128xf32> to vector<8x128xf32>
    %35 = arith.addf %33, %34 : vector<8x128xf32>
    %cst_29 = arith.constant 0.000000e+00 : f32
    %36 = vector.broadcast %cst_29 : f32 to vector<8x128xf32>
    %37 = arith.maximumf %35, %36 : vector<8x128xf32>
    %c1_30 = arith.constant 1 : index
    %c0_31 = arith.constant 0 : index
    %c0_32 = arith.constant 0 : index
    %38 = vector.load %arg4[%c1_30, %c0_31, %c0_32] : memref<2x128x128xbf16, #tpu.memory_space<vmem>>, vector<1x128x128xbf16>
    %39 = vector.shape_cast %38 : vector<1x128x128xbf16> to vector<128x128xbf16>
    %c1_33 = arith.constant 1 : index
    %c0_34 = arith.constant 0 : index
    %c0_35 = arith.constant 0 : index
    %40 = vector.load %arg7[%c1_33, %c0_34, %c0_35] : memref<2x1x128xf32, #tpu.memory_space<vmem>>, vector<1x1x128xf32>
    %41 = vector.shape_cast %40 : vector<1x1x128xf32> to vector<1x128xf32>
    %42 = arith.truncf %37 : vector<8x128xf32> to vector<8x128xbf16>
    %cst_36 = arith.constant dense<0.000000e+00> : vector<8x128xf32>
    %43 = tpu.matmul %42, %39, %cst_36 {dimension_numbers = #tpu.dot_dimension_numbers<[1], [0], [0], [1], [0, 0, 1, 1], [], []>} : vector<8x128xbf16>, vector<128x128xbf16>, vector<8x128xf32> -> vector<8x128xf32>
    %44 = vector.broadcast %41 : vector<1x128xf32> to vector<8x128xf32>
    %45 = arith.addf %43, %44 : vector<8x128xf32>
    %cst_37 = arith.constant 0.000000e+00 : f32
    %46 = vector.broadcast %cst_37 : f32 to vector<8x128xf32>
    %47 = arith.maximumf %45, %46 : vector<8x128xf32>
    %c1_38 = arith.constant 1 : index
    %c0_39 = arith.constant 0 : index
    %c0_40 = arith.constant 0 : index
    %48 = vector.load %arg5[%c1_38, %c0_39, %c0_40] : memref<2x128x128xbf16, #tpu.memory_space<vmem>>, vector<1x128x128xbf16>
    %49 = vector.shape_cast %48 : vector<1x128x128xbf16> to vector<128x128xbf16>
    %c1_41 = arith.constant 1 : index
    %c0_42 = arith.constant 0 : index
    %c0_43 = arith.constant 0 : index
    %50 = vector.load %arg8[%c1_41, %c0_42, %c0_43] : memref<2x1x128xf32, #tpu.memory_space<vmem>>, vector<1x1x128xf32>
    %51 = vector.shape_cast %50 : vector<1x1x128xf32> to vector<1x128xf32>
    %52 = arith.truncf %47 : vector<8x128xf32> to vector<8x128xbf16>
    %cst_44 = arith.constant dense<0.000000e+00> : vector<8x128xf32>
    %53 = tpu.matmul %52, %49, %cst_44 {dimension_numbers = #tpu.dot_dimension_numbers<[1], [0], [0], [1], [0, 0, 1, 1], [], []>} : vector<8x128xbf16>, vector<128x128xbf16>, vector<8x128xf32> -> vector<8x128xf32>
    %54 = vector.broadcast %51 : vector<1x128xf32> to vector<8x128xf32>
    %55 = arith.addf %53, %54 : vector<8x128xf32>
    %c0_45 = arith.constant 0 : index
    %c0_46 = arith.constant 0 : index
    %56 = vector.load %arg10[%c0_45, %c0_46] : memref<8x128xf32, #tpu.memory_space<vmem>>, vector<8x128xf32>
    tpu.vector_store %arg10[%c0_45, %c0_46], %55 {strides = array<i32>} : memref<8x128xf32, #tpu.memory_space<vmem>>, vector<8x128xf32>,
    return
  }
  func.func @transform_0(%arg0: i32) -> (i32, i32) {
    %c0_i32 = arith.constant 0 : i32
    %c0_i32_0 = arith.constant 0 : i32
    return %arg0, %c0_i32 : i32, i32
  }
  func.func @transform_1(%arg0: i32) -> (i32, i32) {
    %c0_i32 = arith.constant 0 : i32
    %c0_i32_0 = arith.constant 0 : i32
    %c0_i32_1 = arith.constant 0 : i32
    return %c0_i32, %c0_i32_0 : i32, i32
  }
  func.func @transform_2(%arg0: i32) -> (i32, i32) {
    %c0_i32 = arith.constant 0 : i32
    %c0_i32_0 = arith.constant 0 : i32
    %c0_i32_1 = arith.constant 0 : i32
    return %c0_i32, %c0_i32_0 : i32, i32
  }
  func.func @transform_3(%arg0: i32) -> (i32, i32, i32) {
    %c0_i32 = arith.constant 0 : i32
    %c0_i32_0 = arith.constant 0 : i32
    %c0_i32_1 = arith.constant 0 : i32
    %c0_i32_2 = arith.constant 0 : i32
    return %c0_i32, %c0_i32_0, %c0_i32_1 : i32, i32, i32
  }
  func.func @transform_4(%arg0: i32) -> (i32, i32, i32) {
    %c0_i32 = arith.constant 0 : i32
    %c0_i32_0 = arith.constant 0 : i32
    %c0_i32_1 = arith.constant 0 : i32
    %c0_i32_2 = arith.constant 0 : i32
    return %c0_i32, %c0_i32_0, %c0_i32_1 : i32, i32, i32
  }
  func.func @transform_5(%arg0: i32) -> (i32, i32, i32) {
    %c0_i32 = arith.constant 0 : i32
    %c0_i32_0 = arith.constant 0 : i32
    %c0_i32_1 = arith.constant 0 : i32
    %c0_i32_2 = arith.constant 0 : i32
    return %c0_i32, %c0_i32_0, %c0_i32_1 : i32, i32, i32
  }
  func.func @transform_6(%arg0: i32) -> (i32, i32, i32) {
    %c0_i32 = arith.constant 0 : i32
    %c0_i32_0 = arith.constant 0 : i32
    %c0_i32_1 = arith.constant 0 : i32
    %c0_i32_2 = arith.constant 0 : i32
    return %c0_i32, %c0_i32_0, %c0_i32_1 : i32, i32, i32
  }
  func.func @transform_7(%arg0: i32) -> (i32, i32, i32) {
    %c0_i32 = arith.constant 0 : i32
    %c0_i32_0 = arith.constant 0 : i32
    %c0_i32_1 = arith.constant 0 : i32
    %c0_i32_2 = arith.constant 0 : i32
    return %c0_i32, %c0_i32_0, %c0_i32_1 : i32, i32, i32
  }
  func.func @transform_8(%arg0: i32) -> (i32, i32) {
    %c0_i32 = arith.constant 0 : i32
    %c0_i32_0 = arith.constant 0 : i32
    return %arg0, %c0_i32 : i32, i32
  }
  func.func @transform_9(%arg0: i32) -> (i32, i32) {
    %c0_i32 = arith.constant 0 : i32
    %c0_i32_0 = arith.constant 0 : i32
    return %arg0, %c0_i32 : i32, i32
  }
}

</mosaic_0001>

<llo_original>
// kernel: tpu_custom_call.1
$region0: #{tpu_custom_call.1}
  #allocation0 [shape = 'u32[]', space=smem, size = 0x4, offset = 0x4, fixed_abs, tag = 'smem constant byte address 0x4 - core index']
  #allocation1 [shape = 'u32[144,128]{1,0:T(1,128)}', space=vmem, size = 0x12000, scoped, tag = 'internal scratch']
  %s0 = inlined_call_operand.hbm [shape: f32[8,8], index: 0, kind: input, shape index: {}]
  %s1 = inlined_call_operand.hbm [shape: bf16[8,128], index: 1, kind: input, shape index: {}]
  %s2 = inlined_call_operand.hbm [shape: bf16[128,128], index: 2, kind: input, shape index: {}]
  %s3 = inlined_call_operand.hbm [shape: bf16[2,128,128], index: 3, kind: input, shape index: {}]
  %s4 = inlined_call_operand.hbm [shape: bf16[2,128,128], index: 4, kind: input, shape index: {}]
  %s5 = inlined_call_operand.vmem [shape: f32[2,1,128], index: 5, kind: input, shape index: {}]
  %s6 = inlined_call_operand.vmem [shape: f32[2,1,128], index: 6, kind: input, shape index: {}]
  %s7 = inlined_call_operand.vmem [shape: f32[2,1,128], index: 7, kind: input, shape index: {}]
  %s8 = inlined_call_operand.hbm [shape: f32[8,128], index: 8, kind: output, shape index: {0}]
  %s9 = inlined_call_operand.hbm [shape: f32[8,128], index: 9, kind: output, shape index: {1}]
  %10 = xla_tuple %s8, %s9
  %s11 = sld [smem:[#allocation0]]
  $region70: #{tpu_custom_call.1} parent=0
    _
  %s13 = ssub.s32 1, %s11
  %s14 = scalar_select 0, %s13, %s11
  $region1: #{tpu_custom_call.1} parent=0
    #allocation2 [shape = 'u8[4096]{0}', space=vmem, size = 0x1000, scoped, tag = 'input window, operand 0, single buffered']
    #allocation3 [shape = 's32[1]{0}', space=sflag, size = 0x4, scoped, tag = 'scoped memory for tpu_custom_call.1']
    #allocation4 [shape = 's32[1]{0}', space=sflag, size = 0x4, scoped, tag = 'scoped memory for tpu_custom_call.1']
    #allocation5 [shape = 'u8[2048]{0}', space=vmem, size = 0x800, scoped, tag = 'input window, operand 1, single buffered']
    #allocation6 [shape = 's32[1]{0}', space=sflag, size = 0x4, scoped, tag = 'scoped memory for tpu_custom_call.1']
    #allocation7 [shape = 'u8[32768]{0}', space=vmem, size = 0x8000, scoped, tag = 'input window, operand 2, single buffered']
    #allocation8 [shape = 'u8[65536]{0}', space=vmem, size = 0x10000, scoped, tag = 'input window, operand 3, single buffered']
    #allocation9 [shape = 's32[1]{0}', space=sflag, size = 0x4, scoped, tag = 'scoped memory for tpu_custom_call.1']
    #allocation10 [shape = 'u8[65536]{0}', space=vmem, size = 0x10000, scoped, tag = 'input window, operand 4, single buffered']
    #allocation11 [shape = 'u8[4096]{0}', space=vmem, size = 0x1000, scoped, tag = 'output window, operand 0, single buffered']
    #allocation12 [shape = 'u8[4096]{0}', space=vmem, size = 0x1000, scoped, tag = 'output window, operand 1, single buffered']
    #allocation13 [shape = 's32[1]{0}', space=sflag, size = 0x4, scoped, tag = 'scoped memory for tpu_custom_call.1']
    %15 = vsyncpa [#allocation3], 0
    %16 = vsyncpa [#allocation6], 0
    %17 = vsyncpa [#allocation9], 0
    %18 = vsyncpa [#allocation4], 0
    %19 = vsyncpa [#allocation13], 0
    // Predicated region
    $region2: #{tpu_custom_call.1} parent=1 // pred_check
      _
    $region3: #{tpu_custom_call.1} parent=1 // pred_check_branch
      %21 = sbr.rel (0) target = $region5
    $region4: #{tpu_custom_call.1} parent=1 // pred_region
      %s23 = ssub.s32 128, 128
      %24 = vsyncadd [#allocation3], %s23
      %s26 = sshll.u32 [#allocation2], 4
      %s27 = int_to_ptr.vmem [resolvable:$true] %s26
      %29 = dma.hbm_to_vmem [thread:$0]  %s0, 128, %s27, [#allocation3]
    $region5: #{tpu_custom_call.1} parent=1 // pred_fallthru
      _
    // Predicated region
    $region6: #{tpu_custom_call.1} parent=1 // pred_check
      _
    $region7: #{tpu_custom_call.1} parent=1 // pred_check_branch
      %31 = sbr.rel (0) target = $region9
    $region8: #{tpu_custom_call.1} parent=1 // pred_region
      %s33 = ssub.s32 64, 64
      %34 = vsyncadd [#allocation6], %s33
      %s36 = sshll.u32 [#allocation5], 4
      %s37 = int_to_ptr.vmem [resolvable:$true] %s36
      %39 = dma.hbm_to_vmem [thread:$0]  %s1, 64, %s37, [#allocation6]
    $region9: #{tpu_custom_call.1} parent=1 // pred_fallthru
      _
    // Predicated region
    $region10: #{tpu_custom_call.1} parent=1 // pred_check
      _
    $region11: #{tpu_custom_call.1} parent=1 // pred_check_branch
      %41 = sbr.rel (0) target = $region13
    $region12: #{tpu_custom_call.1} parent=1 // pred_region
      %s43 = ssub.s32 1024, 1024
      %44 = vsyncadd [#allocation6], %s43
      %s45 = sshll.u32 [#allocation7], 4
      %s46 = int_to_ptr.vmem [resolvable:$true] %s45
      %51 = dma.hbm_to_vmem [thread:$0]  %s2, 1024, %s46, [#allocation6], 64, 64, 4
    $region13: #{tpu_custom_call.1} parent=1 // pred_fallthru
      _
    // Predicated region
    $region14: #{tpu_custom_call.1} parent=1 // pred_check
      _
    $region15: #{tpu_custom_call.1} parent=1 // pred_check_branch
      %53 = sbr.rel (0) target = $region17
    $region16: #{tpu_custom_call.1} parent=1 // pred_region
      %s55 = ssub.s32 2048, 2048
      %56 = vsyncadd [#allocation9], %s55
      %s57 = sshll.u32 [#allocation8], 4
      %s58 = int_to_ptr.vmem [resolvable:$true] %s57
      %63 = dma.hbm_to_vmem [thread:$0]  %s3, 2048, %s58, [#allocation9], 64, 64, 4
    $region17: #{tpu_custom_call.1} parent=1 // pred_fallthru
      _
    // Predicated region
    $region18: #{tpu_custom_call.1} parent=1 // pred_check
      _
    $region19: #{tpu_custom_call.1} parent=1 // pred_check_branch
      %65 = sbr.rel (0) target = $region21
    $region20: #{tpu_custom_call.1} parent=1 // pred_region
      %s67 = ssub.s32 2048, 2048
      %68 = vsyncadd [#allocation9], %s67
      %s69 = sshll.u32 [#allocation10], 4
      %s70 = int_to_ptr.vmem [resolvable:$true] %s69
      %75 = dma.hbm_to_vmem [thread:$0]  %s4, 2048, %s70, [#allocation9], 64, 64, 4
    $region21: #{tpu_custom_call.1} parent=1 // pred_fallthru
      _
    // Predicated region
    $region22: #{tpu_custom_call.1} parent=1 // pred_check
      _
    $region23: #{tpu_custom_call.1} parent=1 // pred_check_branch
      %77 = sbr.rel (0) target = $region25
    $region24: #{tpu_custom_call.1} parent=1 // pred_region
      _
    $region25: #{tpu_custom_call.1} parent=1 // pred_fallthru
      _
    // Predicated region
    $region26: #{tpu_custom_call.1} parent=1 // pred_check
      _
    $region27: #{tpu_custom_call.1} parent=1 // pred_check_branch
      %79 = sbr.rel (0) target = $region29
    $region28: #{tpu_custom_call.1} parent=1 // pred_region
      _
    $region29: #{tpu_custom_call.1} parent=1 // pred_fallthru
      _
    // Predicated region
    $region30: #{tpu_custom_call.1} parent=1 // pred_check
      _
    $region31: #{tpu_custom_call.1} parent=1 // pred_check_branch
      %81 = sbr.rel (0) target = $region33
    $region32: #{tpu_custom_call.1} parent=1 // pred_region
      _
    $region33: #{tpu_custom_call.1} parent=1 // pred_fallthru
      _
    // Predicated region
    $region34: #{tpu_custom_call.1} parent=1 // pred_check
      _
    $region35: #{tpu_custom_call.1} parent=1 // pred_check_branch
      %83 = sbr.rel (0) target = $region37
    $region36: #{tpu_custom_call.1} parent=1 // pred_region
      %84 = dma.done [#allocation3], 128
    $region37: #{tpu_custom_call.1} parent=1 // pred_fallthru
      _
    // Predicated region
    $region38: #{tpu_custom_call.1} parent=1 // pred_check
      _
    $region39: #{tpu_custom_call.1} parent=1 // pred_check_branch
      %86 = sbr.rel (0) target = $region41
    $region40: #{tpu_custom_call.1} parent=1 // pred_region
      %87 = dma.done [#allocation6], 64
    $region41: #{tpu_custom_call.1} parent=1 // pred_fallthru
      _
    // Predicated region
    $region42: #{tpu_custom_call.1} parent=1 // pred_check
      _
    $region43: #{tpu_custom_call.1} parent=1 // pred_check_branch
      %89 = sbr.rel (0) target = $region45
    $region44: #{tpu_custom_call.1} parent=1 // pred_region
      %90 = dma.done [#allocation6], 1024
    $region45: #{tpu_custom_call.1} parent=1 // pred_fallthru
      _
    // Predicated region
    $region46: #{tpu_custom_call.1} parent=1 // pred_check
      _
    $region47: #{tpu_custom_call.1} parent=1 // pred_check_branch
      %92 = sbr.rel (0) target = $region49
    $region48: #{tpu_custom_call.1} parent=1 // pred_region
      %93 = dma.done [#allocation9], 2048
    $region49: #{tpu_custom_call.1} parent=1 // pred_fallthru
      _
    // Predicated region
    $region50: #{tpu_custom_call.1} parent=1 // pred_check
      _
    $region51: #{tpu_custom_call.1} parent=1 // pred_check_branch
      %95 = sbr.rel (0) target = $region53
    $region52: #{tpu_custom_call.1} parent=1 // pred_region
      %96 = dma.done [#allocation9], 2048
    $region53: #{tpu_custom_call.1} parent=1 // pred_fallthru
      _
    %v98 = vld [vmem:[#allocation2] sm:$0xff]
    %v99 = vld [vmem:[#allocation5] sm:$0xf]
    %v100 = vld [vmem:[%s5] sm:$0x1]
    %v101 = vpack.c.bf16 %v98, %v98
    %v103 = vlaneseq
    %v104 = vshrl.u32 %v103, 7
    %v105 = vsub.s32 0, %v104
    %v106 = vrot.slane %v100, %v105
    %vm108 = vcmask 64512
    %v110 = vsel %vm108, %v101, 0
    %vm112 = vcmask 1043456
    %v114 = vsel %vm112, %v99, 0
    %116 = vmatprep.subr.bf16.mxu0 0
    %117 = vmatpush1.bf16.msra.mxu0 %v114
    %118 = vmatprep.subr.bf16.mxu0 0
    %119 = vmatpush1.bf16.msra.mxu0 0
    %120 = vmatprep.subr.bf16.mxu0 0
    %121 = vmatpush1.bf16.msra.mxu0 0
    %122 = vmatprep.subr.bf16.mxu0 0
    %123 = vmatpush1.bf16.msra.mxu0 0
    %124 = vmatprep.subr.bf16.mxu0 0
    %125 = vmatpush1.bf16.msra.mxu0 0
    %126 = vmatprep.subr.bf16.mxu0 0
    %127 = vmatpush1.bf16.msra.mxu0 0
    %128 = vmatprep.subr.bf16.mxu0 0
    %129 = vmatpush1.bf16.msra.mxu0 0
    %130 = vmatprep.subr.bf16.mxu0 0
    %131 = vmatpush1.bf16.msra.mxu0 0
    %132 = vmatprep.subr.bf16.mxu0 0
    %133 = vmatpush1.bf16.msra.mxu0 0
    %134 = vmatprep.subr.bf16.mxu0 0
    %135 = vmatpush1.bf16.msra.mxu0 0
    %136 = vmatprep.subr.bf16.mxu0 0
    %137 = vmatpush1.bf16.msra.mxu0 0
    %138 = vmatprep.subr.bf16.mxu0 0
    %139 = vmatpush1.bf16.msra.mxu0 0
    %140 = vmatprep.subr.bf16.mxu0 0
    %141 = vmatpush1.bf16.msra.mxu0 0
    %142 = vmatprep.subr.bf16.mxu0 0
    %143 = vmatpush1.bf16.msra.mxu0 0
    %144 = vmatprep.subr.bf16.mxu0 0
    %145 = vmatpush1.bf16.msra.mxu0 0
    %146 = vmatprep.subr.bf16.mxu0 0
    %147 = vmatpush1.bf16.msra.mxu0 0
    %148 = vmatprep.mubr.bf16.mxu0 0
    %149 = vmatmul.mubr.bf16.gmra.mrb[0].mxu0 %v110
    %v150 = vpop.f32.mrb[0].mxu0
    %v151 = vadd.f32 %v106, %v150
    %v152 = vpop.f32.mrb[0].mxu0
    %v153 = vpop.f32.mrb[0].mxu0
    %v154 = vpop.f32.mrb[0].mxu0
    %155 = vdwg.mxu0
    %v156 = vmax.f32 %v151, 0.0
    %v157 = vld [vmem:[#allocation8] sm:$0xf]
    %v158 = vld [vmem:[#allocation8 + $0x4] sm:$0xf]
    %v159 = vld [vmem:[#allocation8 + $0x8] sm:$0xf]
    %v160 = vld [vmem:[#allocation8 + $0xc] sm:$0xf]
    %v161 = vld [vmem:[#allocation8 + $0x10] sm:$0xf]
    %v162 = vld [vmem:[#allocation8 + $0x14] sm:$0xf]
    %v163 = vld [vmem:[#allocation8 + $0x18] sm:$0xf]
    %v164 = vld [vmem:[#allocation8 + $0x1c] sm:$0xf]
    %v165 = vld [vmem:[#allocation8 + $0x20] sm:$0xf]
    %v166 = vld [vmem:[#allocation8 + $0x24] sm:$0xf]
    %v167 = vld [vmem:[#allocation8 + $0x28] sm:$0xf]
    %v168 = vld [vmem:[#allocation8 + $0x2c] sm:$0xf]
    %v169 = vld [vmem:[#allocation8 + $0x30] sm:$0xf]
    %v170 = vld [vmem:[#allocation8 + $0x34] sm:$0xf]
    %v171 = vld [vmem:[#allocation8 + $0x38] sm:$0xf]
    %v172 = vld [vmem:[#allocation8 + $0x3c] sm:$0xf]
    %v173 = vld [vmem:[%s6] sm:$0x1]
    %v174 = vpack.c.bf16 %v156, %v156
    %v176 = vlaneseq
    %v177 = vshrl.u32 %v176, 7
    %v178 = vsub.s32 0, %v177
    %v179 = vrot.slane %v173, %v178
    %v197 = vunpack.c.l.b16 %v157
    %v198 = vunpack.c.l.b16 %v158
    %v199 = vunpack.c.l.b16 %v159
    %v200 = vunpack.c.l.b16 %v160
    %v201 = vunpack.c.l.b16 %v161
    %v202 = vunpack.c.l.b16 %v162
    %v203 = vunpack.c.l.b16 %v163
    %v204 = vunpack.c.l.b16 %v164
    %v205 = vunpack.c.l.b16 %v165
    %v206 = vunpack.c.l.b16 %v166
    %v207 = vunpack.c.l.b16 %v167
    %v208 = vunpack.c.l.b16 %v168
    %v209 = vunpack.c.l.b16 %v169
    %v210 = vunpack.c.l.b16 %v170
    %v211 = vunpack.c.l.b16 %v171
    %v212 = vunpack.c.l.b16 %v172
    %v213 = vpack.c.b16 %v198, %v197
    %v214 = vpack.c.b16 %v200, %v199
    %v215 = vpack.c.b16 %v202, %v201
    %v216 = vpack.c.b16 %v204, %v203
    %v217 = vpack.c.b16 %v206, %v205
    %v218 = vpack.c.b16 %v208, %v207
    %v219 = vpack.c.b16 %v210, %v209
    %v220 = vpack.c.b16 %v212, %v211
    %229 = vmatprep.subr.bf16.mxu0 0
    %230 = vmatpush1.bf16.msra.mxu0 %v213
    %231 = vmatprep.subr.bf16.mxu0 0
    %232 = vmatpush1.bf16.msra.mxu0 %v214
    %233 = vmatprep.subr.bf16.mxu0 0
    %234 = vmatpush1.bf16.msra.mxu0 %v215
    %235 = vmatprep.subr.bf16.mxu0 0
    %236 = vmatpush1.bf16.msra.mxu0 %v216
    %237 = vmatprep.subr.bf16.mxu0 0
    %238 = vmatpush1.bf16.msra.mxu0 %v217
    %239 = vmatprep.subr.bf16.mxu0 0
    %240 = vmatpush1.bf16.msra.mxu0 %v218
    %241 = vmatprep.subr.bf16.mxu0 0
    %242 = vmatpush1.bf16.msra.mxu0 %v219
    %243 = vmatprep.subr.bf16.mxu0 0
    %244 = vmatpush1.bf16.msra.mxu0 %v220
    %245 = vmatprep.subr.bf16.mxu0 0
    %246 = vmatpush1.bf16.msra.mxu0 0
    %247 = vmatprep.subr.bf16.mxu0 0
    %248 = vmatpush1.bf16.msra.mxu0 0
    %249 = vmatprep.subr.bf16.mxu0 0
    %250 = vmatpush1.bf16.msra.mxu0 0
    %251 = vmatprep.subr.bf16.mxu0 0
    %252 = vmatpush1.bf16.msra.mxu0 0
    %253 = vmatprep.subr.bf16.mxu0 0
    %254 = vmatpush1.bf16.msra.mxu0 0
    %255 = vmatprep.subr.bf16.mxu0 0
    %256 = vmatpush1.bf16.msra.mxu0 0
    %257 = vmatprep.subr.bf16.mxu0 0
    %258 = vmatpush1.bf16.msra.mxu0 0
    %259 = vmatprep.subr.bf16.mxu0 0
    %260 = vmatpush1.bf16.msra.mxu0 0
    %261 = vmatprep.mubr.bf16.mxu0 0
    %262 = vmatmul.mubr.bf16.gmra.mrb[0].mxu0 %v174
    %v263 = vpop.f32.mrb[0].mxu0
    %v264 = vadd.f32 %v179, %v263
    %v265 = vpop.f32.mrb[0].mxu0
    %v266 = vpop.f32.mrb[0].mxu0
    %v267 = vpop.f32.mrb[0].mxu0
    %268 = vdwg.mxu0
    %v269 = vmax.f32 %v264, 0.0
    %v270 = vld [vmem:[#allocation10] sm:$0xf]
    %v271 = vld [vmem:[#allocation10 + $0x4] sm:$0xf]
    %v272 = vld [vmem:[#allocation10 + $0x8] sm:$0xf]
    %v273 = vld [vmem:[#allocation10 + $0xc] sm:$0xf]
    %v274 = vld [vmem:[#allocation10 + $0x10] sm:$0xf]
    %v275 = vld [vmem:[#allocation10 + $0x14] sm:$0xf]
    %v276 = vld [vmem:[#allocation10 + $0x18] sm:$0xf]
    %v277 = vld [vmem:[#allocation10 + $0x1c] sm:$0xf]
    %v278 = vld [vmem:[#allocation10 + $0x20] sm:$0xf]
    %v279 = vld [vmem:[#allocation10 + $0x24] sm:$0xf]
    %v280 = vld [vmem:[#allocation10 + $0x28] sm:$0xf]
    %v281 = vld [vmem:[#allocation10 + $0x2c] sm:$0xf]
    %v282 = vld [vmem:[#allocation10 + $0x30] sm:$0xf]
    %v283 = vld [vmem:[#allocation10 + $0x34] sm:$0xf]
    %v284 = vld [vmem:[#allocation10 + $0x38] sm:$0xf]
    %v285 = vld [vmem:[#allocation10 + $0x3c] sm:$0xf]
    %v286 = vld [vmem:[%s7] sm:$0x1]
    %v287 = vpack.c.bf16 %v269, %v269
    %v289 = vlaneseq
    %v290 = vshrl.u32 %v289, 7
    %v291 = vsub.s32 0, %v290
    %v292 = vrot.slane %v286, %v291
    %v310 = vunpack.c.l.b16 %v270
    %v311 = vunpack.c.l.b16 %v271
    %v312 = vunpack.c.l.b16 %v272
    %v313 = vunpack.c.l.b16 %v273
    %v314 = vunpack.c.l.b16 %v274
    %v315 = vunpack.c.l.b16 %v275
    %v316 = vunpack.c.l.b16 %v276
    %v317 = vunpack.c.l.b16 %v277
    %v318 = vunpack.c.l.b16 %v278
    %v319 = vunpack.c.l.b16 %v279
    %v320 = vunpack.c.l.b16 %v280
    %v321 = vunpack.c.l.b16 %v281
    %v322 = vunpack.c.l.b16 %v282
    %v323 = vunpack.c.l.b16 %v283
    %v324 = vunpack.c.l.b16 %v284
    %v325 = vunpack.c.l.b16 %v285
    %v326 = vpack.c.b16 %v311, %v310
    %v327 = vpack.c.b16 %v313, %v312
    %v328 = vpack.c.b16 %v315, %v314
    %v329 = vpack.c.b16 %v317, %v316
    %v330 = vpack.c.b16 %v319, %v318
    %v331 = vpack.c.b16 %v321, %v320
    %v332 = vpack.c.b16 %v323, %v322
    %v333 = vpack.c.b16 %v325, %v324
    %342 = vmatprep.subr.bf16.mxu0 0
    %343 = vmatpush1.bf16.msra.mxu0 %v326
    %344 = vmatprep.subr.bf16.mxu0 0
    %345 = vmatpush1.bf16.msra.mxu0 %v327
    %346 = vmatprep.subr.bf16.mxu0 0
    %347 = vmatpush1.bf16.msra.mxu0 %v328
    %348 = vmatprep.subr.bf16.mxu0 0
    %349 = vmatpush1.bf16.msra.mxu0 %v329
    %350 = vmatprep.subr.bf16.mxu0 0
    %351 = vmatpush1.bf16.msra.mxu0 %v330
    %352 = vmatprep.subr.bf16.mxu0 0
    %353 = vmatpush1.bf16.msra.mxu0 %v331
    %354 = vmatprep.subr.bf16.mxu0 0
    %355 = vmatpush1.bf16.msra.mxu0 %v332
    %356 = vmatprep.subr.bf16.mxu0 0
    %357 = vmatpush1.bf16.msra.mxu0 %v333
    %358 = vmatprep.subr.bf16.mxu0 0
    %359 = vmatpush1.bf16.msra.mxu0 0
    %360 = vmatprep.subr.bf16.mxu0 0
    %361 = vmatpush1.bf16.msra.mxu0 0
    %362 = vmatprep.subr.bf16.mxu0 0
    %363 = vmatpush1.bf16.msra.mxu0 0
    %364 = vmatprep.subr.bf16.mxu0 0
    %365 = vmatpush1.bf16.msra.mxu0 0
    %366 = vmatprep.subr.bf16.mxu0 0
    %367 = vmatpush1.bf16.msra.mxu0 0
    %368 = vmatprep.subr.bf16.mxu0 0
    %369 = vmatpush1.bf16.msra.mxu0 0
    %370 = vmatprep.subr.bf16.mxu0 0
    %371 = vmatpush1.bf16.msra.mxu0 0
    %372 = vmatprep.subr.bf16.mxu0 0
    %373 = vmatpush1.bf16.msra.mxu0 0
    %374 = vmatprep.mubr.bf16.mxu0 0
    %375 = vmatmul.mubr.bf16.gmra.mrb[0].mxu0 %v287
    %v376 = vpop.f32.mrb[0].mxu0
    %v377 = vadd.f32 %v292, %v376
    %v378 = vpop.f32.mrb[0].mxu0
    %v379 = vpop.f32.mrb[0].mxu0
    %v380 = vpop.f32.mrb[0].mxu0
    %381 = vdwg.mxu0
    %382 = vst [vmem:[#allocation11] sm:$0xff] %v377
    %v383 = vld [vmem:[#allocation7] sm:$0xf]
    %v384 = vld [vmem:[#allocation7 + $0x4] sm:$0xf]
    %v385 = vld [vmem:[#allocation7 + $0x8] sm:$0xf]
    %v386 = vld [vmem:[#allocation7 + $0xc] sm:$0xf]
    %v387 = vld [vmem:[#allocation7 + $0x10] sm:$0xf]
    %v388 = vld [vmem:[#allocation7 + $0x14] sm:$0xf]
    %v389 = vld [vmem:[#allocation7 + $0x18] sm:$0xf]
    %v390 = vld [vmem:[#allocation7 + $0x1c] sm:$0xf]
    %v391 = vld [vmem:[#allocation7 + $0x20] sm:$0xf]
    %v392 = vld [vmem:[#allocation7 + $0x24] sm:$0xf]
    %v393 = vld [vmem:[#allocation7 + $0x28] sm:$0xf]
    %v394 = vld [vmem:[#allocation7 + $0x2c] sm:$0xf]
    %v395 = vld [vmem:[#allocation7 + $0x30] sm:$0xf]
    %v396 = vld [vmem:[#allocation7 + $0x34] sm:$0xf]
    %v397 = vld [vmem:[#allocation7 + $0x38] sm:$0xf]
    %v398 = vld [vmem:[#allocation7 + $0x3c] sm:$0xf]
    %s399 = scalar_lea.vmem %s5, 1
    %v400 = vld [vmem:[%s399] sm:$0x1]
    %v401 = vpack.c.bf16 %v377, %v377
    %v403 = vlaneseq
    %v404 = vshrl.u32 %v403, 7
    %v405 = vsub.s32 0, %v404
    %v406 = vrot.slane %v400, %v405
    %v424 = vunpack.c.l.b16 %v383
    %v425 = vunpack.c.l.b16 %v384
    %v426 = vunpack.c.l.b16 %v385
    %v427 = vunpack.c.l.b16 %v386
    %v428 = vunpack.c.l.b16 %v387
    %v429 = vunpack.c.l.b16 %v388
    %v430 = vunpack.c.l.b16 %v389
    %v431 = vunpack.c.l.b16 %v390
    %v432 = vunpack.c.l.b16 %v391
    %v433 = vunpack.c.l.b16 %v392
    %v434 = vunpack.c.l.b16 %v393
    %v435 = vunpack.c.l.b16 %v394
    %v436 = vunpack.c.l.b16 %v395
    %v437 = vunpack.c.l.b16 %v396
    %v438 = vunpack.c.l.b16 %v397
    %v439 = vunpack.c.l.b16 %v398
    %v440 = vpack.c.b16 %v425, %v424
    %v441 = vpack.c.b16 %v427, %v426
    %v442 = vpack.c.b16 %v429, %v428
    %v443 = vpack.c.b16 %v431, %v430
    %v444 = vpack.c.b16 %v433, %v432
    %v445 = vpack.c.b16 %v435, %v434
    %v446 = vpack.c.b16 %v437, %v436
    %v447 = vpack.c.b16 %v439, %v438
    %456 = vmatprep.subr.bf16.mxu0 0
    %457 = vmatpush1.bf16.msra.mxu0 %v440
    %458 = vmatprep.subr.bf16.mxu0 0
    %459 = vmatpush1.bf16.msra.mxu0 %v441
    %460 = vmatprep.subr.bf16.mxu0 0
    %461 = vmatpush1.bf16.msra.mxu0 %v442
    %462 = vmatprep.subr.bf16.mxu0 0
    %463 = vmatpush1.bf16.msra.mxu0 %v443
    %464 = vmatprep.subr.bf16.mxu0 0
    %465 = vmatpush1.bf16.msra.mxu0 %v444
    %466 = vmatprep.subr.bf16.mxu0 0
    %467 = vmatpush1.bf16.msra.mxu0 %v445
    %468 = vmatprep.subr.bf16.mxu0 0
    %469 = vmatpush1.bf16.msra.mxu0 %v446
    %470 = vmatprep.subr.bf16.mxu0 0
    %471 = vmatpush1.bf16.msra.mxu0 %v447
    %472 = vmatprep.subr.bf16.mxu0 0
    %473 = vmatpush1.bf16.msra.mxu0 0
    %474 = vmatprep.subr.bf16.mxu0 0
    %475 = vmatpush1.bf16.msra.mxu0 0
    %476 = vmatprep.subr.bf16.mxu0 0
    %477 = vmatpush1.bf16.msra.mxu0 0
    %478 = vmatprep.subr.bf16.mxu0 0
    %479 = vmatpush1.bf16.msra.mxu0 0
    %480 = vmatprep.subr.bf16.mxu0 0
    %481 = vmatpush1.bf16.msra.mxu0 0
    %482 = vmatprep.subr.bf16.mxu0 0
    %483 = vmatpush1.bf16.msra.mxu0 0
    %484 = vmatprep.subr.bf16.mxu0 0
    %485 = vmatpush1.bf16.msra.mxu0 0
    %486 = vmatprep.subr.bf16.mxu0 0
    %487 = vmatpush1.bf16.msra.mxu0 0
    %488 = vmatprep.mubr.bf16.mxu0 0
    %489 = vmatmul.mubr.bf16.gmra.mrb[0].mxu0 %v401
    %v490 = vpop.f32.mrb[0].mxu0
    %v491 = vadd.f32 %v406, %v490
    %v492 = vpop.f32.mrb[0].mxu0
    %v493 = vpop.f32.mrb[0].mxu0
    %v494 = vpop.f32.mrb[0].mxu0
    %495 = vdwg.mxu0
    %v496 = vmax.f32 %v491, 0.0
    %s497 = scalar_lea.vmem [#allocation8], 64
    %v498 = vld [vmem:[%s497] sm:$0xf]
    %v499 = vld [vmem:[%s497 + $0x4] sm:$0xf]
    %v500 = vld [vmem:[%s497 + $0x8] sm:$0xf]
    %v501 = vld [vmem:[%s497 + $0xc] sm:$0xf]
    %v502 = vld [vmem:[%s497 + $0x10] sm:$0xf]
    %v503 = vld [vmem:[%s497 + $0x14] sm:$0xf]
    %v504 = vld [vmem:[%s497 + $0x18] sm:$0xf]
    %v505 = vld [vmem:[%s497 + $0x1c] sm:$0xf]
    %v506 = vld [vmem:[%s497 + $0x20] sm:$0xf]
    %v507 = vld [vmem:[%s497 + $0x24] sm:$0xf]
    %v508 = vld [vmem:[%s497 + $0x28] sm:$0xf]
    %v509 = vld [vmem:[%s497 + $0x2c] sm:$0xf]
    %v510 = vld [vmem:[%s497 + $0x30] sm:$0xf]
    %v511 = vld [vmem:[%s497 + $0x34] sm:$0xf]
    %v512 = vld [vmem:[%s497 + $0x38] sm:$0xf]
    %v513 = vld [vmem:[%s497 + $0x3c] sm:$0xf]
    %s514 = scalar_lea.vmem %s6, 1
    %v515 = vld [vmem:[%s514] sm:$0x1]
    %v516 = vpack.c.bf16 %v496, %v496
    %v518 = vlaneseq
    %v519 = vshrl.u32 %v518, 7
    %v520 = vsub.s32 0, %v519
    %v521 = vrot.slane %v515, %v520
    %v539 = vunpack.c.l.b16 %v498
    %v540 = vunpack.c.l.b16 %v499
    %v541 = vunpack.c.l.b16 %v500
    %v542 = vunpack.c.l.b16 %v501
    %v543 = vunpack.c.l.b16 %v502
    %v544 = vunpack.c.l.b16 %v503
    %v545 = vunpack.c.l.b16 %v504
    %v546 = vunpack.c.l.b16 %v505
    %v547 = vunpack.c.l.b16 %v506
    %v548 = vunpack.c.l.b16 %v507
    %v549 = vunpack.c.l.b16 %v508
    %v550 = vunpack.c.l.b16 %v509
    %v551 = vunpack.c.l.b16 %v510
    %v552 = vunpack.c.l.b16 %v511
    %v553 = vunpack.c.l.b16 %v512
    %v554 = vunpack.c.l.b16 %v513
    %v555 = vpack.c.b16 %v540, %v539
    %v556 = vpack.c.b16 %v542, %v541
    %v557 = vpack.c.b16 %v544, %v543
    %v558 = vpack.c.b16 %v546, %v545
    %v559 = vpack.c.b16 %v548, %v547
    %v560 = vpack.c.b16 %v550, %v549
    %v561 = vpack.c.b16 %v552, %v551
    %v562 = vpack.c.b16 %v554, %v553
    %571 = vmatprep.subr.bf16.mxu0 0
    %572 = vmatpush1.bf16.msra.mxu0 %v555
    %573 = vmatprep.subr.bf16.mxu0 0
    %574 = vmatpush1.bf16.msra.mxu0 %v556
    %575 = vmatprep.subr.bf16.mxu0 0
    %576 = vmatpush1.bf16.msra.mxu0 %v557
    %577 = vmatprep.subr.bf16.mxu0 0
    %578 = vmatpush1.bf16.msra.mxu0 %v558
    %579 = vmatprep.subr.bf16.mxu0 0
    %580 = vmatpush1.bf16.msra.mxu0 %v559
    %581 = vmatprep.subr.bf16.mxu0 0
    %582 = vmatpush1.bf16.msra.mxu0 %v560
    %583 = vmatprep.subr.bf16.mxu0 0
    %584 = vmatpush1.bf16.msra.mxu0 %v561
    %585 = vmatprep.subr.bf16.mxu0 0
    %586 = vmatpush1.bf16.msra.mxu0 %v562
    %587 = vmatprep.subr.bf16.mxu0 0
    %588 = vmatpush1.bf16.msra.mxu0 0
    %589 = vmatprep.subr.bf16.mxu0 0
    %590 = vmatpush1.bf16.msra.mxu0 0
    %591 = vmatprep.subr.bf16.mxu0 0
    %592 = vmatpush1.bf16.msra.mxu0 0
    %593 = vmatprep.subr.bf16.mxu0 0
    %594 = vmatpush1.bf16.msra.mxu0 0
    %595 = vmatprep.subr.bf16.mxu0 0
    %596 = vmatpush1.bf16.msra.mxu0 0
    %597 = vmatprep.subr.bf16.mxu0 0
    %598 = vmatpush1.bf16.msra.mxu0 0
    %599 = vmatprep.subr.bf16.mxu0 0
    %600 = vmatpush1.bf16.msra.mxu0 0
    %601 = vmatprep.subr.bf16.mxu0 0
    %602 = vmatpush1.bf16.msra.mxu0 0
    %603 = vmatprep.mubr.bf16.mxu0 0
    %604 = vmatmul.mubr.bf16.gmra.mrb[0].mxu0 %v516
    %v605 = vpop.f32.mrb[0].mxu0
    %v606 = vadd.f32 %v521, %v605
    %v607 = vpop.f32.mrb[0].mxu0
    %v608 = vpop.f32.mrb[0].mxu0
    %v609 = vpop.f32.mrb[0].mxu0
    %610 = vdwg.mxu0
    %v611 = vmax.f32 %v606, 0.0
    %s612 = scalar_lea.vmem [#allocation10], 64
    %v613 = vld [vmem:[%s612] sm:$0xf]
    %v614 = vld [vmem:[%s612 + $0x4] sm:$0xf]
    %v615 = vld [vmem:[%s612 + $0x8] sm:$0xf]
    %v616 = vld [vmem:[%s612 + $0xc] sm:$0xf]
    %v617 = vld [vmem:[%s612 + $0x10] sm:$0xf]
    %v618 = vld [vmem:[%s612 + $0x14] sm:$0xf]
    %v619 = vld [vmem:[%s612 + $0x18] sm:$0xf]
    %v620 = vld [vmem:[%s612 + $0x1c] sm:$0xf]
    %v621 = vld [vmem:[%s612 + $0x20] sm:$0xf]
    %v622 = vld [vmem:[%s612 + $0x24] sm:$0xf]
    %v623 = vld [vmem:[%s612 + $0x28] sm:$0xf]
    %v624 = vld [vmem:[%s612 + $0x2c] sm:$0xf]
    %v625 = vld [vmem:[%s612 + $0x30] sm:$0xf]
    %v626 = vld [vmem:[%s612 + $0x34] sm:$0xf]
    %v627 = vld [vmem:[%s612 + $0x38] sm:$0xf]
    %v628 = vld [vmem:[%s612 + $0x3c] sm:$0xf]
    %s629 = scalar_lea.vmem %s7, 1
    %v630 = vld [vmem:[%s629] sm:$0x1]
    %v631 = vpack.c.bf16 %v611, %v611
    %v633 = vlaneseq
    %v634 = vshrl.u32 %v633, 7
    %v635 = vsub.s32 0, %v634
    %v636 = vrot.slane %v630, %v635
    %v654 = vunpack.c.l.b16 %v613
    %v655 = vunpack.c.l.b16 %v614
    %v656 = vunpack.c.l.b16 %v615
    %v657 = vunpack.c.l.b16 %v616
    %v658 = vunpack.c.l.b16 %v617
    %v659 = vunpack.c.l.b16 %v618
    %v660 = vunpack.c.l.b16 %v619
    %v661 = vunpack.c.l.b16 %v620
    %v662 = vunpack.c.l.b16 %v621
    %v663 = vunpack.c.l.b16 %v622
    %v664 = vunpack.c.l.b16 %v623
    %v665 = vunpack.c.l.b16 %v624
    %v666 = vunpack.c.l.b16 %v625
    %v667 = vunpack.c.l.b16 %v626
    %v668 = vunpack.c.l.b16 %v627
    %v669 = vunpack.c.l.b16 %v628
    %v670 = vpack.c.b16 %v655, %v654
    %v671 = vpack.c.b16 %v657, %v656
    %v672 = vpack.c.b16 %v659, %v658
    %v673 = vpack.c.b16 %v661, %v660
    %v674 = vpack.c.b16 %v663, %v662
    %v675 = vpack.c.b16 %v665, %v664
    %v676 = vpack.c.b16 %v667, %v666
    %v677 = vpack.c.b16 %v669, %v668
    %686 = vmatprep.subr.bf16.mxu0 0
    %687 = vmatpush1.bf16.msra.mxu0 %v670
    %688 = vmatprep.subr.bf16.mxu0 0
    %689 = vmatpush1.bf16.msra.mxu0 %v671
    %690 = vmatprep.subr.bf16.mxu0 0
    %691 = vmatpush1.bf16.msra.mxu0 %v672
    %692 = vmatprep.subr.bf16.mxu0 0
    %693 = vmatpush1.bf16.msra.mxu0 %v673
    %694 = vmatprep.subr.bf16.mxu0 0
    %695 = vmatpush1.bf16.msra.mxu0 %v674
    %696 = vmatprep.subr.bf16.mxu0 0
    %697 = vmatpush1.bf16.msra.mxu0 %v675
    %698 = vmatprep.subr.bf16.mxu0 0
    %699 = vmatpush1.bf16.msra.mxu0 %v676
    %700 = vmatprep.subr.bf16.mxu0 0
    %701 = vmatpush1.bf16.msra.mxu0 %v677
    %702 = vmatprep.subr.bf16.mxu0 0
    %703 = vmatpush1.bf16.msra.mxu0 0
    %704 = vmatprep.subr.bf16.mxu0 0
    %705 = vmatpush1.bf16.msra.mxu0 0
    %706 = vmatprep.subr.bf16.mxu0 0
    %707 = vmatpush1.bf16.msra.mxu0 0
    %708 = vmatprep.subr.bf16.mxu0 0
    %709 = vmatpush1.bf16.msra.mxu0 0
    %710 = vmatprep.subr.bf16.mxu0 0
    %711 = vmatpush1.bf16.msra.mxu0 0
    %712 = vmatprep.subr.bf16.mxu0 0
    %713 = vmatpush1.bf16.msra.mxu0 0
    %714 = vmatprep.subr.bf16.mxu0 0
    %715 = vmatpush1.bf16.msra.mxu0 0
    %716 = vmatprep.subr.bf16.mxu0 0
    %717 = vmatpush1.bf16.msra.mxu0 0
    %718 = vmatprep.mubr.bf16.mxu0 0
    %719 = vmatmul.mubr.bf16.gmra.mrb[0].mxu0 %v631
    %v720 = vpop.f32.mrb[0].mxu0
    %v721 = vadd.f32 %v636, %v720
    %v722 = vpop.f32.mrb[0].mxu0
    %v723 = vpop.f32.mrb[0].mxu0
    %v724 = vpop.f32.mrb[0].mxu0
    %725 = vdwg.mxu0
    %726 = vst [vmem:[#allocation12] sm:$0xff] %v721
    // Predicated region
    $region54: #{tpu_custom_call.1} parent=1 // pred_check
      _
    $region55: #{tpu_custom_call.1} parent=1 // pred_check_branch
      %728 = sbr.rel (0) target = $region57
    $region56: #{tpu_custom_call.1} parent=1 // pred_region
      %s730 = ssub.s32 128, 128
      %731 = vsyncadd [#allocation4], %s730
      %s733 = sshll.u32 [#allocation11], 4
      %s734 = int_to_ptr.vmem [resolvable:$true] %s733
      %736 = dma.vmem_to_hbm [thread:$0]  %s734, 128, %s8, [#allocation4]
    $region57: #{tpu_custom_call.1} parent=1 // pred_fallthru
      _
    // Predicated region
    $region58: #{tpu_custom_call.1} parent=1 // pred_check
      _
    $region59: #{tpu_custom_call.1} parent=1 // pred_check_branch
      %738 = sbr.rel (0) target = $region61
    $region60: #{tpu_custom_call.1} parent=1 // pred_region
      %s740 = ssub.s32 128, 128
      %741 = vsyncadd [#allocation13], %s740
      %s743 = sshll.u32 [#allocation12], 4
      %s744 = int_to_ptr.vmem [resolvable:$true] %s743
      %746 = dma.vmem_to_hbm [thread:$0]  %s744, 128, %s9, [#allocation13]
    $region61: #{tpu_custom_call.1} parent=1 // pred_fallthru
      _
    // Predicated region
    $region62: #{tpu_custom_call.1} parent=1 // pred_check
      _
    $region63: #{tpu_custom_call.1} parent=1 // pred_check_branch
      %748 = sbr.rel (0) target = $region65
    $region64: #{tpu_custom_call.1} parent=1 // pred_region
      %749 = dma.done [#allocation4], 128
    $region65: #{tpu_custom_call.1} parent=1 // pred_fallthru
      _
    // Predicated region
    $region66: #{tpu_custom_call.1} parent=1 // pred_check
      _
    $region67: #{tpu_custom_call.1} parent=1 // pred_check_branch
      %751 = sbr.rel (0) target = $region69
    $region68: #{tpu_custom_call.1} parent=1 // pred_region
      %752 = dma.done [#allocation13], 128
    $region69: #{tpu_custom_call.1} parent=1 // pred_fallthru
      _
    %753 = vsyncpa [#allocation3], 1
    %754 = vsyncpa [#allocation6], 1
    %755 = vsyncpa [#allocation9], 1
    %756 = vsyncpa [#allocation4], 1
    %757 = vsyncpa [#allocation13], 1

// kernel: tpu_custom_call.1
$region0: #{tpu_custom_call.1}
  #allocation0 [shape = 'u32[]', space=smem, size = 0x4, offset = 0x4, fixed_abs, tag = 'smem constant byte address 0x4 - core index']
  #allocation1 [shape = 'u32[144,128]{1,0:T(1,128)}', space=vmem, size = 0x12000, scoped, tag = 'internal scratch']
  %s0 = inlined_call_operand.hbm [shape: f32[8,8], index: 0, kind: input, shape index: {}]
  %s1 = inlined_call_operand.hbm [shape: bf16[8,128], index: 1, kind: input, shape index: {}]
  %s2 = inlined_call_operand.hbm [shape: bf16[128,128], index: 2, kind: input, shape index: {}]
  %s3 = inlined_call_operand.hbm [shape: bf16[2,128,128], index: 3, kind: input, shape index: {}]
  %s4 = inlined_call_operand.hbm [shape: bf16[2,128,128], index: 4, kind: input, shape index: {}]
  %s5 = inlined_call_operand.vmem [shape: f32[2,1,128], index: 5, kind: input, shape index: {}]
  %s6 = inlined_call_operand.vmem [shape: f32[2,1,128], index: 6, kind: input, shape index: {}]
  %s7 = inlined_call_operand.vmem [shape: f32[2,1,128], index: 7, kind: input, shape index: {}]
  %s8 = inlined_call_operand.hbm [shape: f32[8,128], index: 8, kind: output, shape index: {0}]
  %s9 = inlined_call_operand.hbm [shape: f32[8,128], index: 9, kind: output, shape index: {1}]
  %10 = xla_tuple %s8, %s9
  %s11 = sld [smem:[#allocation0]]
  $region70: #{tpu_custom_call.1} parent=0
    _
  %s13 = ssub.s32 1, %s11
  %s14 = scalar_select 0, %s13, %s11
  $region1: #{tpu_custom_call.1} parent=0
    #allocation2 [shape = 'u8[4096]{0}', space=vmem, size = 0x1000, scoped, tag = 'input window, operand 0, single buffered']
    #allocation3 [shape = 's32[1]{0}', space=sflag, size = 0x4, scoped, tag = 'scoped memory for tpu_custom_call.1']
    #allocation4 [shape = 's32[1]{0}', space=sflag, size = 0x4, scoped, tag = 'scoped memory for tpu_custom_call.1']
    #allocation5 [shape = 'u8[2048]{0}', space=vmem, size = 0x800, scoped, tag = 'input window, operand 1, single buffered']
    #allocation6 [shape = 's32[1]{0}', space=sflag, size = 0x4, scoped, tag = 'scoped memory for tpu_custom_call.1']
    #allocation7 [shape = 'u8[32768]{0}', space=vmem, size = 0x8000, scoped, tag = 'input window, operand 2, single buffered']
    #allocation8 [shape = 'u8[65536]{0}', space=vmem, size = 0x10000, scoped, tag = 'input window, operand 3, single buffered']
    #allocation9 [shape = 's32[1]{0}', space=sflag, size = 0x4, scoped, tag = 'scoped memory for tpu_custom_call.1']
    #allocation10 [shape = 'u8[65536]{0}', space=vmem, size = 0x10000, scoped, tag = 'input window, operand 4, single buffered']
    #allocation11 [shape = 'u8[4096]{0}', space=vmem, size = 0x1000, scoped, tag = 'output window, operand 0, single buffered']
    #allocation12 [shape = 'u8[4096]{0}', space=vmem, size = 0x1000, scoped, tag = 'output window, operand 1, single buffered']
    #allocation13 [shape = 's32[1]{0}', space=sflag, size = 0x4, scoped, tag = 'scoped memory for tpu_custom_call.1']
    %15 = vsyncpa [#allocation3], 0
    %16 = vsyncpa [#allocation6], 0
    %17 = vsyncpa [#allocation9], 0
    %18 = vsyncpa [#allocation4], 0
    %19 = vsyncpa [#allocation13], 0
    // Predicated region
    $region2: #{tpu_custom_call.1} parent=1 // pred_check
      _
    $region3: #{tpu_custom_call.1} parent=1 // pred_check_branch
      %21 = sbr.rel (0) target = $region5
    $region4: #{tpu_custom_call.1} parent=1 // pred_region
      %s23 = ssub.s32 128, 128
      %24 = vsyncadd [#allocation3], %s23
      %s26 = sshll.u32 [#allocation2], 4
      %s27 = int_to_ptr.vmem [resolvable:$true] %s26
      %29 = dma.hbm_to_vmem [thread:$0]  %s0, 128, %s27, [#allocation3]
    $region5: #{tpu_custom_call.1} parent=1 // pred_fallthru
      _
    // Predicated region
    $region6: #{tpu_custom_call.1} parent=1 // pred_check
      _
    $region7: #{tpu_custom_call.1} parent=1 // pred_check_branch
      %31 = sbr.rel (0) target = $region9
    $region8: #{tpu_custom_call.1} parent=1 // pred_region
      %s33 = ssub.s32 64, 64
      %34 = vsyncadd [#allocation6], %s33
      %s36 = sshll.u32 [#allocation5], 4
      %s37 = int_to_ptr.vmem [resolvable:$true] %s36
      %39 = dma.hbm_to_vmem [thread:$0]  %s1, 64, %s37, [#allocation6]
    $region9: #{tpu_custom_call.1} parent=1 // pred_fallthru
      _
    // Predicated region
    $region10: #{tpu_custom_call.1} parent=1 // pred_check
      _
    $region11: #{tpu_custom_call.1} parent=1 // pred_check_branch
      %41 = sbr.rel (0) target = $region13
    $region12: #{tpu_custom_call.1} parent=1 // pred_region
      %s43 = ssub.s32 1024, 1024
      %44 = vsyncadd [#allocation6], %s43
      %s45 = sshll.u32 [#allocation7], 4
      %s46 = int_to_ptr.vmem [resolvable:$true] %s45
      %51 = dma.hbm_to_vmem [thread:$0]  %s2, 1024, %s46, [#allocation6], 64, 64, 4
    $region13: #{tpu_custom_call.1} parent=1 // pred_fallthru
      _
    // Predicated region
    $region14: #{tpu_custom_call.1} parent=1 // pred_check
      _
    $region15: #{tpu_custom_call.1} parent=1 // pred_check_branch
      %53 = sbr.rel (0) target = $region17
    $region16: #{tpu_custom_call.1} parent=1 // pred_region
      %s55 = ssub.s32 2048, 2048
      %56 = vsyncadd [#allocation9], %s55
      %s57 = sshll.u32 [#allocation8], 4
      %s58 = int_to_ptr.vmem [resolvable:$true] %s57
      %63 = dma.hbm_to_vmem [thread:$0]  %s3, 2048, %s58, [#allocation9], 64, 64, 4
    $region17: #{tpu_custom_call.1} parent=1 // pred_fallthru
      _
    // Predicated region
    $region18: #{tpu_custom_call.1} parent=1 // pred_check
      _
    $region19: #{tpu_custom_call.1} parent=1 // pred_check_branch
      %65 = sbr.rel (0) target = $region21
    $region20: #{tpu_custom_call.1} parent=1 // pred_region
      %s67 = ssub.s32 2048, 2048
      %68 = vsyncadd [#allocation9], %s67
      %s69 = sshll.u32 [#allocation10], 4
      %s70 = int_to_ptr.vmem [resolvable:$true] %s69
      %75 = dma.hbm_to_vmem [thread:$0]  %s4, 2048, %s70, [#allocation9], 64, 64, 4
    $region21: #{tpu_custom_call.1} parent=1 // pred_fallthru
      _
    // Predicated region
    $region22: #{tpu_custom_call.1} parent=1 // pred_check
      _
    $region23: #{tpu_custom_call.1} parent=1 // pred_check_branch
      %77 = sbr.rel (0) target = $region25
    $region24: #{tpu_custom_call.1} parent=1 // pred_region
      _
    $region25: #{tpu_custom_call.1} parent=1 // pred_fallthru
      _
    // Predicated region
    $region26: #{tpu_custom_call.1} parent=1 // pred_check
      _
    $region27: #{tpu_custom_call.1} parent=1 // pred_check_branch
      %79 = sbr.rel (0) target = $region29
    $region28: #{tpu_custom_call.1} parent=1 // pred_region
      _
    $region29: #{tpu_custom_call.1} parent=1 // pred_fallthru
      _
    // Predicated region
    $region30: #{tpu_custom_call.1} parent=1 // pred_check
      _
    $region31: #{tpu_custom_call.1} parent=1 // pred_check_branch
      %81 = sbr.rel (0) target = $region33
    $region32: #{tpu_custom_call.1} parent=1 // pred_region
      _
    $region33: #{tpu_custom_call.1} parent=1 // pred_fallthru
      _
    // Predicated region
    $region34: #{tpu_custom_call.1} parent=1 // pred_check
      _
    $region35: #{tpu_custom_call.1} parent=1 // pred_check_branch
      %83 = sbr.rel (0) target = $region37
    $region36: #{tpu_custom_call.1} parent=1 // pred_region
      %84 = dma.done [#allocation3], 128
    $region37: #{tpu_custom_call.1} parent=1 // pred_fallthru
      _
    // Predicated region
    $region38: #{tpu_custom_call.1} parent=1 // pred_check
      _
    $region39: #{tpu_custom_call.1} parent=1 // pred_check_branch
      %86 = sbr.rel (0) target = $region41
    $region40: #{tpu_custom_call.1} parent=1 // pred_region
      %87 = dma.done [#allocation6], 64
    $region41: #{tpu_custom_call.1} parent=1 // pred_fallthru
      _
    // Predicated region
    $region42: #{tpu_custom_call.1} parent=1 // pred_check
      _
    $region43: #{tpu_custom_call.1} parent=1 // pred_check_branch
      %89 = sbr.rel (0) target = $region45
    $region44: #{tpu_custom_call.1} parent=1 // pred_region
      %90 = dma.done [#allocation6], 1024
    $region45: #{tpu_custom_call.1} parent=1 // pred_fallthru
      _
    // Predicated region
    $region46: #{tpu_custom_call.1} parent=1 // pred_check
      _
    $region47: #{tpu_custom_call.1} parent=1 // pred_check_branch
      %92 = sbr.rel (0) target = $region49
    $region48: #{tpu_custom_call.1} parent=1 // pred_region
      %93 = dma.done [#allocation9], 2048
    $region49: #{tpu_custom_call.1} parent=1 // pred_fallthru
      _
    // Predicated region
    $region50: #{tpu_custom_call.1} parent=1 // pred_check
      _
    $region51: #{tpu_custom_call.1} parent=1 // pred_check_branch
      %95 = sbr.rel (0) target = $region53
    $region52: #{tpu_custom_call.1} parent=1 // pred_region
      %96 = dma.done [#allocation9], 2048
    $region53: #{tpu_custom_call.1} parent=1 // pred_fallthru
      _
    %v98 = vld [vmem:[#allocation2] sm:$0xff]
    %v99 = vld [vmem:[#allocation5] sm:$0xf]
    %v100 = vld [vmem:[%s5] sm:$0x1]
    %v101 = vpack.c.bf16 %v98, %v98
    %v103 = vlaneseq
    %v104 = vshrl.u32 %v103, 7
    %v105 = vsub.s32 0, %v104
    %v106 = vrot.slane %v100, %v105
    %vm108 = vcmask 64512
    %v110 = vsel %vm108, %v101, 0
    %vm112 = vcmask 1043456
    %v114 = vsel %vm112, %v99, 0
    %116 = vmatprep.subr.bf16.mxu0 0
    %117 = vmatpush1.bf16.msra.mxu0 %v114
    %118 = vmatprep.subr.bf16.mxu0 0
    %119 = vmatpush1.bf16.msra.mxu0 0
    %120 = vmatprep.subr.bf16.mxu0 0
    %121 = vmatpush1.bf16.msra.mxu0 0
    %122 = vmatprep.subr.bf16.mxu0 0
    %123 = vmatpush1.bf16.msra.mxu0 0
    %124 = vmatprep.subr.bf16.mxu0 0
    %125 = vmatpush1.bf16.msra.mxu0 0
    %126 = vmatprep.subr.bf16.mxu0 0
    %127 = vmatpush1.bf16.msra.mxu0 0
    %128 = vmatprep.subr.bf16.mxu0 0
    %129 = vmatpush1.bf16.msra.mxu0 0
    %130 = vmatprep.subr.bf16.mxu0 0
    %131 = vmatpush1.bf16.msra.mxu0 0
    %132 = vmatprep.subr.bf16.mxu0 0
    %133 = vmatpush1.bf16.msra.mxu0 0
    %134 = vmatprep.subr.bf16.mxu0 0
    %135 = vmatpush1.bf16.msra.mxu0 0
    %136 = vmatprep.subr.bf16.mxu0 0
    %137 = vmatpush1.bf16.msra.mxu0 0
    %138 = vmatprep.subr.bf16.mxu0 0
    %139 = vmatpush1.bf16.msra.mxu0 0
    %140 = vmatprep.subr.bf16.mxu0 0
    %141 = vmatpush1.bf16.msra.mxu0 0
    %142 = vmatprep.subr.bf16.mxu0 0
    %143 = vmatpush1.bf16.msra.mxu0 0
    %144 = vmatprep.subr.bf16.mxu0 0
    %145 = vmatpush1.bf16.msra.mxu0 0
    %146 = vmatprep.subr.bf16.mxu0 0
    %147 = vmatpush1.bf16.msra.mxu0 0
    %148 = vmatprep.mubr.bf16.mxu0 0
    %149 = vmatmul.mubr.bf16.gmra.mrb[0].mxu0 %v110
    %v150 = vpop.f32.mrb[0].mxu0
    %v151 = vadd.f32 %v106, %v150
    %v152 = vpop.f32.mrb[0].mxu0
    %v153 = vpop.f32.mrb[0].mxu0
    %v154 = vpop.f32.mrb[0].mxu0
    %155 = vdwg.mxu0
    %v156 = vmax.f32 %v151, 0.0
    %v157 = vld [vmem:[#allocation8] sm:$0xf]
    %v158 = vld [vmem:[#allocation8 + $0x4] sm:$0xf]
    %v159 = vld [vmem:[#allocation8 + $0x8] sm:$0xf]
    %v160 = vld [vmem:[#allocation8 + $0xc] sm:$0xf]
    %v161 = vld [vmem:[#allocation8 + $0x10] sm:$0xf]
    %v162 = vld [vmem:[#allocation8 + $0x14] sm:$0xf]
    %v163 = vld [vmem:[#allocation8 + $0x18] sm:$0xf]
    %v164 = vld [vmem:[#allocation8 + $0x1c] sm:$0xf]
    %v165 = vld [vmem:[#allocation8 + $0x20] sm:$0xf]
    %v166 = vld [vmem:[#allocation8 + $0x24] sm:$0xf]
    %v167 = vld [vmem:[#allocation8 + $0x28] sm:$0xf]
    %v168 = vld [vmem:[#allocation8 + $0x2c] sm:$0xf]
    %v169 = vld [vmem:[#allocation8 + $0x30] sm:$0xf]
    %v170 = vld [vmem:[#allocation8 + $0x34] sm:$0xf]
    %v171 = vld [vmem:[#allocation8 + $0x38] sm:$0xf]
    %v172 = vld [vmem:[#allocation8 + $0x3c] sm:$0xf]
    %v173 = vld [vmem:[%s6] sm:$0x1]
    %v174 = vpack.c.bf16 %v156, %v156
    %v176 = vlaneseq
    %v177 = vshrl.u32 %v176, 7
    %v178 = vsub.s32 0, %v177
    %v179 = vrot.slane %v173, %v178
    %v197 = vunpack.c.l.b16 %v157
    %v198 = vunpack.c.l.b16 %v158
    %v199 = vunpack.c.l.b16 %v159
    %v200 = vunpack.c.l.b16 %v160
    %v201 = vunpack.c.l.b16 %v161
    %v202 = vunpack.c.l.b16 %v162
    %v203 = vunpack.c.l.b16 %v163
    %v204 = vunpack.c.l.b16 %v164
    %v205 = vunpack.c.l.b16 %v165
    %v206 = vunpack.c.l.b16 %v166
    %v207 = vunpack.c.l.b16 %v167
    %v208 = vunpack.c.l.b16 %v168
    %v209 = vunpack.c.l.b16 %v169
    %v210 = vunpack.c.l.b16 %v170
    %v211 = vunpack.c.l.b16 %v171
    %v212 = vunpack.c.l.b16 %v172
    %v213 = vpack.c.b16 %v198, %v197
    %v214 = vpack.c.b16 %v200, %v199
    %v215 = vpack.c.b16 %v202, %v201
    %v216 = vpack.c.b16 %v204, %v203
    %v217 = vpack.c.b16 %v206, %v205
    %v218 = vpack.c.b16 %v208, %v207
    %v219 = vpack.c.b16 %v210, %v209
    %v220 = vpack.c.b16 %v212, %v211
    %229 = vmatprep.subr.bf16.mxu0 0
    %230 = vmatpush1.bf16.msra.mxu0 %v213
    %231 = vmatprep.subr.bf16.mxu0 0
    %232 = vmatpush1.bf16.msra.mxu0 %v214
    %233 = vmatprep.subr.bf16.mxu0 0
    %234 = vmatpush1.bf16.msra.mxu0 %v215
    %235 = vmatprep.subr.bf16.mxu0 0
    %236 = vmatpush1.bf16.msra.mxu0 %v216
    %237 = vmatprep.subr.bf16.mxu0 0
    %238 = vmatpush1.bf16.msra.mxu0 %v217
    %239 = vmatprep.subr.bf16.mxu0 0
    %240 = vmatpush1.bf16.msra.mxu0 %v218
    %241 = vmatprep.subr.bf16.mxu0 0
    %242 = vmatpush1.bf16.msra.mxu0 %v219
    %243 = vmatprep.subr.bf16.mxu0 0
    %244 = vmatpush1.bf16.msra.mxu0 %v220
    %245 = vmatprep.subr.bf16.mxu0 0
    %246 = vmatpush1.bf16.msra.mxu0 0
    %247 = vmatprep.subr.bf16.mxu0 0
    %248 = vmatpush1.bf16.msra.mxu0 0
    %249 = vmatprep.subr.bf16.mxu0 0
    %250 = vmatpush1.bf16.msra.mxu0 0
    %251 = vmatprep.subr.bf16.mxu0 0
    %252 = vmatpush1.bf16.msra.mxu0 0
    %253 = vmatprep.subr.bf16.mxu0 0
    %254 = vmatpush1.bf16.msra.mxu0 0
    %255 = vmatprep.subr.bf16.mxu0 0
    %256 = vmatpush1.bf16.msra.mxu0 0
    %257 = vmatprep.subr.bf16.mxu0 0
    %258 = vmatpush1.bf16.msra.mxu0 0
    %259 = vmatprep.subr.bf16.mxu0 0
    %260 = vmatpush1.bf16.msra.mxu0 0
    %261 = vmatprep.mubr.bf16.mxu0 0
    %262 = vmatmul.mubr.bf16.gmra.mrb[0].mxu0 %v174
    %v263 = vpop.f32.mrb[0].mxu0
    %v264 = vadd.f32 %v179, %v263
    %v265 = vpop.f32.mrb[0].mxu0
    %v266 = vpop.f32.mrb[0].mxu0
    %v267 = vpop.f32.mrb[0].mxu0
    %268 = vdwg.mxu0
    %v269 = vmax.f32 %v264, 0.0
    %v270 = vld [vmem:[#allocation10] sm:$0xf]
    %v271 = vld [vmem:[#allocation10 + $0x4] sm:$0xf]
    %v272 = vld [vmem:[#allocation10 + $0x8] sm:$0xf]
    %v273 = vld [vmem:[#allocation10 + $0xc] sm:$0xf]
    %v274 = vld [vmem:[#allocation10 + $0x10] sm:$0xf]
    %v275 = vld [vmem:[#allocation10 + $0x14] sm:$0xf]
    %v276 = vld [vmem:[#allocation10 + $0x18] sm:$0xf]
    %v277 = vld [vmem:[#allocation10 + $0x1c] sm:$0xf]
    %v278 = vld [vmem:[#allocation10 + $0x20] sm:$0xf]
    %v279 = vld [vmem:[#allocation10 + $0x24] sm:$0xf]
    %v280 = vld [vmem:[#allocation10 + $0x28] sm:$0xf]
    %v281 = vld [vmem:[#allocation10 + $0x2c] sm:$0xf]
    %v282 = vld [vmem:[#allocation10 + $0x30] sm:$0xf]
    %v283 = vld [vmem:[#allocation10 + $0x34] sm:$0xf]
    %v284 = vld [vmem:[#allocation10 + $0x38] sm:$0xf]
    %v285 = vld [vmem:[#allocation10 + $0x3c] sm:$0xf]
    %v286 = vld [vmem:[%s7] sm:$0x1]
    %v287 = vpack.c.bf16 %v269, %v269
    %v289 = vlaneseq
    %v290 = vshrl.u32 %v289, 7
    %v291 = vsub.s32 0, %v290
    %v292 = vrot.slane %v286, %v291
    %v310 = vunpack.c.l.b16 %v270
    %v311 = vunpack.c.l.b16 %v271
    %v312 = vunpack.c.l.b16 %v272
    %v313 = vunpack.c.l.b16 %v273
    %v314 = vunpack.c.l.b16 %v274
    %v315 = vunpack.c.l.b16 %v275
    %v316 = vunpack.c.l.b16 %v276
    %v317 = vunpack.c.l.b16 %v277
    %v318 = vunpack.c.l.b16 %v278
    %v319 = vunpack.c.l.b16 %v279
    %v320 = vunpack.c.l.b16 %v280
    %v321 = vunpack.c.l.b16 %v281
    %v322 = vunpack.c.l.b16 %v282
    %v323 = vunpack.c.l.b16 %v283
    %v324 = vunpack.c.l.b16 %v284
    %v325 = vunpack.c.l.b16 %v285
    %v326 = vpack.c.b16 %v311, %v310
    %v327 = vpack.c.b16 %v313, %v312
    %v328 = vpack.c.b16 %v315, %v314
    %v329 = vpack.c.b16 %v317, %v316
    %v330 = vpack.c.b16 %v319, %v318
    %v331 = vpack.c.b16 %v321, %v320
    %v332 = vpack.c.b16 %v323, %v322
    %v333 = vpack.c.b16 %v325, %v324
    %342 = vmatprep.subr.bf16.mxu0 0
    %343 = vmatpush1.bf16.msra.mxu0 %v326
    %344 = vmatprep.subr.bf16.mxu0 0
    %345 = vmatpush1.bf16.msra.mxu0 %v327
    %346 = vmatprep.subr.bf16.mxu0 0
    %347 = vmatpush1.bf16.msra.mxu0 %v328
    %348 = vmatprep.subr.bf16.mxu0 0
    %349 = vmatpush1.bf16.msra.mxu0 %v329
    %350 = vmatprep.subr.bf16.mxu0 0
    %351 = vmatpush1.bf16.msra.mxu0 %v330
    %352 = vmatprep.subr.bf16.mxu0 0
    %353 = vmatpush1.bf16.msra.mxu0 %v331
    %354 = vmatprep.subr.bf16.mxu0 0
    %355 = vmatpush1.bf16.msra.mxu0 %v332
    %356 = vmatprep.subr.bf16.mxu0 0
    %357 = vmatpush1.bf16.msra.mxu0 %v333
    %358 = vmatprep.subr.bf16.mxu0 0
    %359 = vmatpush1.bf16.msra.mxu0 0
    %360 = vmatprep.subr.bf16.mxu0 0
    %361 = vmatpush1.bf16.msra.mxu0 0
    %362 = vmatprep.subr.bf16.mxu0 0
    %363 = vmatpush1.bf16.msra.mxu0 0
    %364 = vmatprep.subr.bf16.mxu0 0
    %365 = vmatpush1.bf16.msra.mxu0 0
    %366 = vmatprep.subr.bf16.mxu0 0
    %367 = vmatpush1.bf16.msra.mxu0 0
    %368 = vmatprep.subr.bf16.mxu0 0
    %369 = vmatpush1.bf16.msra.mxu0 0
    %370 = vmatprep.subr.bf16.mxu0 0
    %371 = vmatpush1.bf16.msra.mxu0 0
    %372 = vmatprep.subr.bf16.mxu0 0
    %373 = vmatpush1.bf16.msra.mxu0 0
    %374 = vmatprep.mubr.bf16.mxu0 0
    %375 = vmatmul.mubr.bf16.gmra.mrb[0].mxu0 %v287
    %v376 = vpop.f32.mrb[0].mxu0
    %v377 = vadd.f32 %v292, %v376
    %v378 = vpop.f32.mrb[0].mxu0
    %v379 = vpop.f32.mrb[0].mxu0
    %v380 = vpop.f32.mrb[0].mxu0
    %381 = vdwg.mxu0
    %382 = vst [vmem:[#allocation11] sm:$0xff] %v377
    %v383 = vld [vmem:[#allocation7] sm:$0xf]
    %v384 = vld [vmem:[#allocation7 + $0x4] sm:$0xf]
    %v385 = vld [vmem:[#allocation7 + $0x8] sm:$0xf]
    %v386 = vld [vmem:[#allocation7 + $0xc] sm:$0xf]
    %v387 = vld [vmem:[#allocation7 + $0x10] sm:$0xf]
    %v388 = vld [vmem:[#allocation7 + $0x14] sm:$0xf]
    %v389 = vld [vmem:[#allocation7 + $0x18] sm:$0xf]
    %v390 = vld [vmem:[#allocation7 + $0x1c] sm:$0xf]
    %v391 = vld [vmem:[#allocation7 + $0x20] sm:$0xf]
    %v392 = vld [vmem:[#allocation7 + $0x24] sm:$0xf]
    %v393 = vld [vmem:[#allocation7 + $0x28] sm:$0xf]
    %v394 = vld [vmem:[#allocation7 + $0x2c] sm:$0xf]
    %v395 = vld [vmem:[#allocation7 + $0x30] sm:$0xf]
    %v396 = vld [vmem:[#allocation7 + $0x34] sm:$0xf]
    %v397 = vld [vmem:[#allocation7 + $0x38] sm:$0xf]
    %v398 = vld [vmem:[#allocation7 + $0x3c] sm:$0xf]
    %s399 = scalar_lea.vmem %s5, 1
    %v400 = vld [vmem:[%s399] sm:$0x1]
    %v401 = vpack.c.bf16 %v377, %v377
    %v403 = vlaneseq
    %v404 = vshrl.u32 %v403, 7
    %v405 = vsub.s32 0, %v404
    %v406 = vrot.slane %v400, %v405
    %v424 = vunpack.c.l.b16 %v383
    %v425 = vunpack.c.l.b16 %v384
    %v426 = vunpack.c.l.b16 %v385
    %v427 = vunpack.c.l.b16 %v386
    %v428 = vunpack.c.l.b16 %v387
    %v429 = vunpack.c.l.b16 %v388
    %v430 = vunpack.c.l.b16 %v389
    %v431 = vunpack.c.l.b16 %v390
    %v432 = vunpack.c.l.b16 %v391
    %v433 = vunpack.c.l.b16 %v392
    %v434 = vunpack.c.l.b16 %v393
    %v435 = vunpack.c.l.b16 %v394
    %v436 = vunpack.c.l.b16 %v395
    %v437 = vunpack.c.l.b16 %v396
    %v438 = vunpack.c.l.b16 %v397
    %v439 = vunpack.c.l.b16 %v398
    %v440 = vpack.c.b16 %v425, %v424
    %v441 = vpack.c.b16 %v427, %v426
    %v442 = vpack.c.b16 %v429, %v428
    %v443 = vpack.c.b16 %v431, %v430
    %v444 = vpack.c.b16 %v433, %v432
    %v445 = vpack.c.b16 %v435, %v434
    %v446 = vpack.c.b16 %v437, %v436
    %v447 = vpack.c.b16 %v439, %v438
    %456 = vmatprep.subr.bf16.mxu0 0
    %457 = vmatpush1.bf16.msra.mxu0 %v440
    %458 = vmatprep.subr.bf16.mxu0 0
    %459 = vmatpush1.bf16.msra.mxu0 %v441
    %460 = vmatprep.subr.bf16.mxu0 0
    %461 = vmatpush1.bf16.msra.mxu0 %v442
    %462 = vmatprep.subr.bf16.mxu0 0
    %463 = vmatpush1.bf16.msra.mxu0 %v443
    %464 = vmatprep.subr.bf16.mxu0 0
    %465 = vmatpush1.bf16.msra.mxu0 %v444
    %466 = vmatprep.subr.bf16.mxu0 0
    %467 = vmatpush1.bf16.msra.mxu0 %v445
    %468 = vmatprep.subr.bf16.mxu0 0
    %469 = vmatpush1.bf16.msra.mxu0 %v446
    %470 = vmatprep.subr.bf16.mxu0 0
    %471 = vmatpush1.bf16.msra.mxu0 %v447
    %472 = vmatprep.subr.bf16.mxu0 0
    %473 = vmatpush1.bf16.msra.mxu0 0
    %474 = vmatprep.subr.bf16.mxu0 0
    %475 = vmatpush1.bf16.msra.mxu0 0
    %476 = vmatprep.subr.bf16.mxu0 0
    %477 = vmatpush1.bf16.msra.mxu0 0
    %478 = vmatprep.subr.bf16.mxu0 0
    %479 = vmatpush1.bf16.msra.mxu0 0
    %480 = vmatprep.subr.bf16.mxu0 0
    %481 = vmatpush1.bf16.msra.mxu0 0
    %482 = vmatprep.subr.bf16.mxu0 0
    %483 = vmatpush1.bf16.msra.mxu0 0
    %484 = vmatprep.subr.bf16.mxu0 0
    %485 = vmatpush1.bf16.msra.mxu0 0
    %486 = vmatprep.subr.bf16.mxu0 0
    %487 = vmatpush1.bf16.msra.mxu0 0
    %488 = vmatprep.mubr.bf16.mxu0 0
    %489 = vmatmul.mubr.bf16.gmra.mrb[0].mxu0 %v401
    %v490 = vpop.f32.mrb[0].mxu0
    %v491 = vadd.f32 %v406, %v490
    %v492 = vpop.f32.mrb[0].mxu0
    %v493 = vpop.f32.mrb[0].mxu0
    %v494 = vpop.f32.mrb[0].mxu0
    %495 = vdwg.mxu0
    %v496 = vmax.f32 %v491, 0.0
    %s497 = scalar_lea.vmem [#allocation8], 64
    %v498 = vld [vmem:[%s497] sm:$0xf]
    %v499 = vld [vmem:[%s497 + $0x4] sm:$0xf]
    %v500 = vld [vmem:[%s497 + $0x8] sm:$0xf]
    %v501 = vld [vmem:[%s497 + $0xc] sm:$0xf]
    %v502 = vld [vmem:[%s497 + $0x10] sm:$0xf]
    %v503 = vld [vmem:[%s497 + $0x14] sm:$0xf]
    %v504 = vld [vmem:[%s497 + $0x18] sm:$0xf]
    %v505 = vld [vmem:[%s497 + $0x1c] sm:$0xf]
    %v506 = vld [vmem:[%s497 + $0x20] sm:$0xf]
    %v507 = vld [vmem:[%s497 + $0x24] sm:$0xf]
    %v508 = vld [vmem:[%s497 + $0x28] sm:$0xf]
    %v509 = vld [vmem:[%s497 + $0x2c] sm:$0xf]
    %v510 = vld [vmem:[%s497 + $0x30] sm:$0xf]
    %v511 = vld [vmem:[%s497 + $0x34] sm:$0xf]
    %v512 = vld [vmem:[%s497 + $0x38] sm:$0xf]
    %v513 = vld [vmem:[%s497 + $0x3c] sm:$0xf]
    %s514 = scalar_lea.vmem %s6, 1
    %v515 = vld [vmem:[%s514] sm:$0x1]
    %v516 = vpack.c.bf16 %v496, %v496
    %v518 = vlaneseq
    %v519 = vshrl.u32 %v518, 7
    %v520 = vsub.s32 0, %v519
    %v521 = vrot.slane %v515, %v520
    %v539 = vunpack.c.l.b16 %v498
    %v540 = vunpack.c.l.b16 %v499
    %v541 = vunpack.c.l.b16 %v500
    %v542 = vunpack.c.l.b16 %v501
    %v543 = vunpack.c.l.b16 %v502
    %v544 = vunpack.c.l.b16 %v503
    %v545 = vunpack.c.l.b16 %v504
    %v546 = vunpack.c.l.b16 %v505
    %v547 = vunpack.c.l.b16 %v506
    %v548 = vunpack.c.l.b16 %v507
    %v549 = vunpack.c.l.b16 %v508
    %v550 = vunpack.c.l.b16 %v509
    %v551 = vunpack.c.l.b16 %v510
    %v552 = vunpack.c.l.b16 %v511
    %v553 = vunpack.c.l.b16 %v512
    %v554 = vunpack.c.l.b16 %v513
    %v555 = vpack.c.b16 %v540, %v539
    %v556 = vpack.c.b16 %v542, %v541
    %v557 = vpack.c.b16 %v544, %v543
    %v558 = vpack.c.b16 %v546, %v545
    %v559 = vpack.c.b16 %v548, %v547
    %v560 = vpack.c.b16 %v550, %v549
    %v561 = vpack.c.b16 %v552, %v551
    %v562 = vpack.c.b16 %v554, %v553
    %571 = vmatprep.subr.bf16.mxu0 0
    %572 = vmatpush1.bf16.msra.mxu0 %v555
    %573 = vmatprep.subr.bf16.mxu0 0
    %574 = vmatpush1.bf16.msra.mxu0 %v556
    %575 = vmatprep.subr.bf16.mxu0 0
    %576 = vmatpush1.bf16.msra.mxu0 %v557
    %577 = vmatprep.subr.bf16.mxu0 0
    %578 = vmatpush1.bf16.msra.mxu0 %v558
    %579 = vmatprep.subr.bf16.mxu0 0
    %580 = vmatpush1.bf16.msra.mxu0 %v559
    %581 = vmatprep.subr.bf16.mxu0 0
    %582 = vmatpush1.bf16.msra.mxu0 %v560
    %583 = vmatprep.subr.bf16.mxu0 0
    %584 = vmatpush1.bf16.msra.mxu0 %v561
    %585 = vmatprep.subr.bf16.mxu0 0
    %586 = vmatpush1.bf16.msra.mxu0 %v562
    %587 = vmatprep.subr.bf16.mxu0 0
    %588 = vmatpush1.bf16.msra.mxu0 0
    %589 = vmatprep.subr.bf16.mxu0 0
    %590 = vmatpush1.bf16.msra.mxu0 0
    %591 = vmatprep.subr.bf16.mxu0 0
    %592 = vmatpush1.bf16.msra.mxu0 0
    %593 = vmatprep.subr.bf16.mxu0 0
    %594 = vmatpush1.bf16.msra.mxu0 0
    %595 = vmatprep.subr.bf16.mxu0 0
    %596 = vmatpush1.bf16.msra.mxu0 0
    %597 = vmatprep.subr.bf16.mxu0 0
    %598 = vmatpush1.bf16.msra.mxu0 0
    %599 = vmatprep.subr.bf16.mxu0 0
    %600 = vmatpush1.bf16.msra.mxu0 0
    %601 = vmatprep.subr.bf16.mxu0 0
    %602 = vmatpush1.bf16.msra.mxu0 0
    %603 = vmatprep.mubr.bf16.mxu0 0
    %604 = vmatmul.mubr.bf16.gmra.mrb[0].mxu0 %v516
    %v605 = vpop.f32.mrb[0].mxu0
    %v606 = vadd.f32 %v521, %v605
    %v607 = vpop.f32.mrb[0].mxu0
    %v608 = vpop.f32.mrb[0].mxu0
    %v609 = vpop.f32.mrb[0].mxu0
    %610 = vdwg.mxu0
    %v611 = vmax.f32 %v606, 0.0
    %s612 = scalar_lea.vmem [#allocation10], 64
    %v613 = vld [vmem:[%s612] sm:$0xf]
    %v614 = vld [vmem:[%s612 + $0x4] sm:$0xf]
    %v615 = vld [vmem:[%s612 + $0x8] sm:$0xf]
    %v616 = vld [vmem:[%s612 + $0xc] sm:$0xf]
    %v617 = vld [vmem:[%s612 + $0x10] sm:$0xf]
    %v618 = vld [vmem:[%s612 + $0x14] sm:$0xf]
    %v619 = vld [vmem:[%s612 + $0x18] sm:$0xf]
    %v620 = vld [vmem:[%s612 + $0x1c] sm:$0xf]
    %v621 = vld [vmem:[%s612 + $0x20] sm:$0xf]
    %v622 = vld [vmem:[%s612 + $0x24] sm:$0xf]
    %v623 = vld [vmem:[%s612 + $0x28] sm:$0xf]
    %v624 = vld [vmem:[%s612 + $0x2c] sm:$0xf]
    %v625 = vld [vmem:[%s612 + $0x30] sm:$0xf]
    %v626 = vld [vmem:[%s612 + $0x34] sm:$0xf]
    %v627 = vld [vmem:[%s612 + $0x38] sm:$0xf]
    %v628 = vld [vmem:[%s612 + $0x3c] sm:$0xf]
    %s629 = scalar_lea.vmem %s7, 1
    %v630 = vld [vmem:[%s629] sm:$0x1]
    %v631 = vpack.c.bf16 %v611, %v611
    %v633 = vlaneseq
    %v634 = vshrl.u32 %v633, 7
    %v635 = vsub.s32 0, %v634
    %v636 = vrot.slane %v630, %v635
    %v654 = vunpack.c.l.b16 %v613
    %v655 = vunpack.c.l.b16 %v614
    %v656 = vunpack.c.l.b16 %v615
    %v657 = vunpack.c.l.b16 %v616
    %v658 = vunpack.c.l.b16 %v617
    %v659 = vunpack.c.l.b16 %v618
    %v660 = vunpack.c.l.b16 %v619
    %v661 = vunpack.c.l.b16 %v620
    %v662 = vunpack.c.l.b16 %v621
    %v663 = vunpack.c.l.b16 %v622
    %v664 = vunpack.c.l.b16 %v623
    %v665 = vunpack.c.l.b16 %v624
    %v666 = vunpack.c.l.b16 %v625
    %v667 = vunpack.c.l.b16 %v626
    %v668 = vunpack.c.l.b16 %v627
    %v669 = vunpack.c.l.b16 %v628
    %v670 = vpack.c.b16 %v655, %v654
    %v671 = vpack.c.b16 %v657, %v656
    %v672 = vpack.c.b16 %v659, %v658
    %v673 = vpack.c.b16 %v661, %v660
    %v674 = vpack.c.b16 %v663, %v662
    %v675 = vpack.c.b16 %v665, %v664
    %v676 = vpack.c.b16 %v667, %v666
    %v677 = vpack.c.b16 %v669, %v668
    %686 = vmatprep.subr.bf16.mxu0 0
    %687 = vmatpush1.bf16.msra.mxu0 %v670
    %688 = vmatprep.subr.bf16.mxu0 0
    %689 = vmatpush1.bf16.msra.mxu0 %v671
    %690 = vmatprep.subr.bf16.mxu0 0
    %691 = vmatpush1.bf16.msra.mxu0 %v672
    %692 = vmatprep.subr.bf16.mxu0 0
    %693 = vmatpush1.bf16.msra.mxu0 %v673
    %694 = vmatprep.subr.bf16.mxu0 0
    %695 = vmatpush1.bf16.msra.mxu0 %v674
    %696 = vmatprep.subr.bf16.mxu0 0
    %697 = vmatpush1.bf16.msra.mxu0 %v675
    %698 = vmatprep.subr.bf16.mxu0 0
    %699 = vmatpush1.bf16.msra.mxu0 %v676
    %700 = vmatprep.subr.bf16.mxu0 0
    %701 = vmatpush1.bf16.msra.mxu0 %v677
    %702 = vmatprep.subr.bf16.mxu0 0
    %703 = vmatpush1.bf16.msra.mxu0 0
    %704 = vmatprep.subr.bf16.mxu0 0
    %705 = vmatpush1.bf16.msra.mxu0 0
    %706 = vmatprep.subr.bf16.mxu0 0
    %707 = vmatpush1.bf16.msra.mxu0 0
    %708 = vmatprep.subr.bf16.mxu0 0
    %709 = vmatpush1.bf16.msra.mxu0 0
    %710 = vmatprep.subr.bf16.mxu0 0
    %711 = vmatpush1.bf16.msra.mxu0 0
    %712 = vmatprep.subr.bf16.mxu0 0
    %713 = vmatpush1.bf16.msra.mxu0 0
    %714 = vmatprep.subr.bf16.mxu0 0
    %715 = vmatpush1.bf16.msra.mxu0 0
    %716 = vmatprep.subr.bf16.mxu0 0
    %717 = vmatpush1.bf16.msra.mxu0 0
    %718 = vmatprep.mubr.bf16.mxu0 0
    %719 = vmatmul.mubr.bf16.gmra.mrb[0].mxu0 %v631
    %v720 = vpop.f32.mrb[0].mxu0
    %v721 = vadd.f32 %v636, %v720
    %v722 = vpop.f32.mrb[0].mxu0
    %v723 = vpop.f32.mrb[0].mxu0
    %v724 = vpop.f32.mrb[0].mxu0
    %725 = vdwg.mxu0
    %726 = vst [vmem:[#allocation12] sm:$0xff] %v721
    // Predicated region
    $region54: #{tpu_custom_call.1} parent=1 // pred_check
      _
    $region55: #{tpu_custom_call.1} parent=1 // pred_check_branch
      %728 = sbr.rel (0) target = $region57
    $region56: #{tpu_custom_call.1} parent=1 // pred_region
      %s730 = ssub.s32 128, 128
      %731 = vsyncadd [#allocation4], %s730
      %s733 = sshll.u32 [#allocation11], 4
      %s734 = int_to_ptr.vmem [resolvable:$true] %s733
      %736 = dma.vmem_to_hbm [thread:$0]  %s734, 128, %s8, [#allocation4]
    $region57: #{tpu_custom_call.1} parent=1 // pred_fallthru
      _
    // Predicated region
    $region58: #{tpu_custom_call.1} parent=1 // pred_check
      _
    $region59: #{tpu_custom_call.1} parent=1 // pred_check_branch
      %738 = sbr.rel (0) target = $region61
    $region60: #{tpu_custom_call.1} parent=1 // pred_region
      %s740 = ssub.s32 128, 128
      %741 = vsyncadd [#allocation13], %s740
      %s743 = sshll.u32 [#allocation12], 4
      %s744 = int_to_ptr.vmem [resolvable:$true] %s743
      %746 = dma.vmem_to_hbm [thread:$0]  %s744, 128, %s9, [#allocation13]
    $region61: #{tpu_custom_call.1} parent=1 // pred_fallthru
      _
    // Predicated region
    $region62: #{tpu_custom_call.1} parent=1 // pred_check
      _
    $region63: #{tpu_custom_call.1} parent=1 // pred_check_branch
      %748 = sbr.rel (0) target = $region65
    $region64: #{tpu_custom_call.1} parent=1 // pred_region
      %749 = dma.done [#allocation4], 128
    $region65: #{tpu_custom_call.1} parent=1 // pred_fallthru
      _
    // Predicated region
    $region66: #{tpu_custom_call.1} parent=1 // pred_check
      _
    $region67: #{tpu_custom_call.1} parent=1 // pred_check_branch
      %751 = sbr.rel (0) target = $region69
    $region68: #{tpu_custom_call.1} parent=1 // pred_region
      %752 = dma.done [#allocation13], 128
    $region69: #{tpu_custom_call.1} parent=1 // pred_fallthru
      _
    %753 = vsyncpa [#allocation3], 1
    %754 = vsyncpa [#allocation6], 1
    %755 = vsyncpa [#allocation9], 1
    %756 = vsyncpa [#allocation4], 1
    %757 = vsyncpa [#allocation13], 1

</llo_original>
